<compile_context>
chip_gen: v7x
topology: tpu7x:2x2x1
jax: 0.10.0
libtpu: 0.0.40
codegen_flags: <defaults>
</compile_context>

<pallas_src>
from functools import partial

import jax
import jax.numpy as jnp
from jax import lax
from jax.experimental import pallas as pl
from jax.experimental.pallas import tpu as pltpu  # noqa: F401  (TPU backend)

# ----------------------------- model config ---------------------------------
M_DYNAMICS = 4        # m_dynamics
STATES_DIM = 16       # states_dim
OBS_DIM = 32          # observable_dim
N_ENC_LAYERS = 3      # n_encoder_layers
L0_UNITS = 64         # l0_units
UNITS_FACTOR = 0.5
K_FWD = 1             # k_forward_prediction (fused kernel assumes 1)
MIN_EIG, MAX_EIG = 0.01, 1.0
BATCH = 2
SEQ = 8               # T (time steps per dynamics)


# ----------------------------- fused Pallas kernel ---------------------------
def _midst_fused_kernel(x_ref, ew0_ref, ew1_ref, ew2_ref,
                        dw0_ref, dw1_ref, dw2_ref,
                        u_ref, v_ref, s_ref,
                        obs_ref, s1_ref, koop_ref, dec_ref,
                        *, b, m_dyn, t, d):
    """Whole MIDST forward in one kernel; everything resident in VMEM.

    x_ref   : (B*M*T, S)    flattened input states
    ew*_ref : encoder FC weights (no bias)
    dw*_ref : decoder FC weights (no bias)
    u_ref   : (D, D), v_ref : (D, D), s_ref : (M, D) sorted |sigma|
    obs_ref : (B*M*T, D)    encoder output (states_0)
    s1_ref  : (B*M*T, D)    Koopman-advanced observables (states_1)
    koop_ref: (M*D, D)      stacked Koopman operators K[m]
    dec_ref : (2*B*M*T, S)  decoder output: rows [0, BMT) = pred, rest = recon
    """
    f32 = jnp.float32
    # contract the LAST dim of both operands  ==  lhs @ rhs.T  (no XLU transpose)
    dot_t = (((1,), (1,)), ((), ()))

    # ---------------- encoder: fused 3-layer FC (relu between layers) --------
    h = x_ref[...]                                                    # (BMT, S)
    h = jnp.maximum(jnp.dot(h, ew0_ref[...], preferred_element_type=f32), 0.0)
    h = jnp.maximum(jnp.dot(h, ew1_ref[...], preferred_element_type=f32), 0.0)
    obs = jnp.dot(h, ew2_ref[...], preferred_element_type=f32)        # (BMT, D)
    obs_ref[...] = obs

    # -------- Koopman build: K[m] = U diag(s[m]) V^T  (one 128-row matmul) ---
    u = u_ref[...]                                                    # (D, D)
    v = v_ref[...]                                                    # (D, D)
    s = s_ref[...]                                                    # (M, D)
    us = jnp.concatenate(
        [u * s[m:m + 1, :] for m in range(m_dyn)], axis=0)            # (M*D, D)
    koop = lax.dot_general(us, v, dot_t, preferred_element_type=f32)  # (M*D, D)
    koop_ref[...] = koop

    # -------- Koopman apply: states_1[b, m] = obs[b, m] @ K[m]^T --------------
    mt = m_dyn * t
    ys = []
    for m in range(m_dyn):
        # gather the (B*T, D) rows belonging to dynamics m (sublane-aligned slices)
        xm = jnp.concatenate(
            [obs[bi * mt + m * t: bi * mt + (m + 1) * t, :] for bi in range(b)],
            axis=0)                                                   # (B*T, D)
        km = koop[m * d:(m + 1) * d, :]                               # (D, D)
        ys.append(lax.dot_general(xm, km, dot_t, preferred_element_type=f32))
    # re-interleave back to flat (b-major, m, t) row order
    s1 = jnp.concatenate(
        [ys[m][bi * t:(bi + 1) * t, :] for bi in range(b) for m in range(m_dyn)],
        axis=0)                                                       # (BMT, D)
    s1_ref[...] = s1

    # -------- decoder ONCE on stacked [states_1 ; obs] (128-row operand) ------
    g = jnp.concatenate([s1, obs], axis=0)                            # (2*BMT, D)
    g = jnp.maximum(jnp.dot(g, dw0_ref[...], preferred_element_type=f32), 0.0)
    g = jnp.maximum(jnp.dot(g, dw1_ref[...], preferred_element_type=f32), 0.0)
    dec_ref[...] = jnp.dot(g, dw2_ref[...], preferred_element_type=f32)


# ----------------------------- parameter init --------------------------------
def _orthogonal(key, n):
    a = jax.random.normal(key, (n, n), jnp.float32)
    q, r = jnp.linalg.qr(a)
    return q * jnp.sign(jnp.diag(r))[None, :]


def _fc_weights(key, input_dim, output_dim, n_layers, l0_units, units_factor):
    dims = [input_dim]
    u = float(l0_units)
    for _ in range(n_layers - 1):
        dims.append(int(u))
        u = u * units_factor
    dims.append(output_dim)
    ws = []
    for i in range(n_layers):
        key, sub = jax.random.split(key)
        fan_in, fan_out = dims[i], dims[i + 1]
        std = (2.0 / (fan_in + fan_out)) ** 0.5  # xavier-normal, bias=False
        ws.append(std * jax.random.normal(sub, (fan_in, fan_out), jnp.float32))
    return ws


def init_params(key):
    k_enc, k_dec, k_u, k_v = jax.random.split(key, 4)
    enc = _fc_weights(k_enc, STATES_DIM, OBS_DIM, N_ENC_LAYERS,
                      L0_UNITS, UNITS_FACTOR)
    dec_l0 = int(L0_UNITS * UNITS_FACTOR ** (N_ENC_LAYERS - 1))
    dec = _fc_weights(k_dec, OBS_DIM, STATES_DIM, N_ENC_LAYERS,
                      dec_l0, 1.0 / UNITS_FACTOR)
    # temporal_sharing=True, separate_dynamics=False -> single U, V
    u = _orthogonal(k_u, OBS_DIM)
    v = _orthogonal(k_v, OBS_DIM)
    # sigmas: linspace(max_init_eig_val, min_init_eig_val, D) per (t, m)
    sig_row = jnp.linspace(MAX_EIG, MIN_EIG, OBS_DIM, dtype=jnp.float32)
    sigma = jnp.broadcast_to(sig_row, (K_FWD, M_DYNAMICS, OBS_DIM))
    return {"enc": enc, "dec": dec, "U": [u], "V": [v], "sigma": sigma}


# ----------------------------- forward pass ----------------------------------
def midst_forward(states_t_0, params):
    assert states_t_0.ndim == 4
    bsz, m_dyn, t_seq, s_dim = states_t_0.shape
    assert m_dyn == M_DYNAMICS
    assert s_dim == STATES_DIM
    assert K_FWD == 1  # TODO(synk): k_forward_prediction > 1 not wired into fused kernel
    d = OBS_DIM
    n = bsz * m_dyn * t_seq

    x2 = states_t_0.reshape(n, s_dim)
    ew0, ew1, ew2 = params["enc"]
    dw0, dw1, dw2 = params["dec"]
    u = params["U"][0]                                     # temporal sharing
    v = params["V"][0]
    # sort |sigma| descending (k_forward_prediction == 1)
    s_sorted = -jnp.sort(-jnp.abs(params["sigma"][0]), axis=-1)   # (M, D)

    enc_w = params["enc"]
    dec_w = params["dec"]
    flops = (2 * n * sum(int(w.shape[0]) * int(w.shape[1]) for w in enc_w)   # encoder
             + 2 * (m_dyn * d) * d * d                                       # K build
             + 2 * n * d * d                                                 # K apply
             + 2 * (2 * n) * sum(int(w.shape[0]) * int(w.shape[1]) for w in dec_w))
    bytes_accessed = 4 * (x2.size
                          + sum(int(w.size) for w in enc_w)
                          + sum(int(w.size) for w in dec_w)
                          + int(u.size) + int(v.size) + int(s_sorted.size)
                          + 2 * n * d + m_dyn * d * d + 2 * n * s_dim)

    obs_flat, s1_flat, koop_flat, dec_out = pl.pallas_call(
        partial(_midst_fused_kernel, b=bsz, m_dyn=m_dyn, t=t_seq, d=d),
        out_shape=(
            jax.ShapeDtypeStruct((n, d), jnp.float32),            # states_0
            jax.ShapeDtypeStruct((n, d), jnp.float32),            # states_1
            jax.ShapeDtypeStruct((m_dyn * d, d), jnp.float32),    # Koopman ops
            jax.ShapeDtypeStruct((2 * n, s_dim), jnp.float32),    # [pred ; recon]
        ),
        cost_estimate=pl.CostEstimate(flops=int(flops), transcendentals=0,
                                      bytes_accessed=int(bytes_accessed)),
    )(x2, ew0, ew1, ew2, dw0, dw1, dw2, u, v, s_sorted)

    observables_t_0 = obs_flat.reshape(bsz, m_dyn, t_seq, d)
    states_1 = s1_flat.reshape(bsz, m_dyn, t_seq, d)
    koopmans = [koop_flat.reshape(m_dyn, d, d)]
    states_t = dec_out[:n].reshape(bsz, m_dyn, t_seq, s_dim)
    reconstruction = dec_out[n:].reshape(bsz, m_dyn, t_seq, s_dim)

    return {
        "predictions": states_t,
        "other": {
            "states_0": observables_t_0,
            "states_1": states_1,
            "reconstruction": reconstruction,
            "dynamics": koopmans,
            "V_per_t": params["V"],
            "U_per_t": params["U"],
            "S_per_t": params["sigma"],
        },
    }


# ----------------------------- pure-JAX reference ----------------------------
def _reference_forward(states_t_0, params):
    def fc(h, ws):
        for i, w in enumerate(ws):
            h = h @ w
            if i < len(ws) - 1:
                h = jnp.maximum(h, 0.0)
        return h

    obs = fc(states_t_0, params["enc"])
    outs = []
    koops = []
    for t in range(K_FWD):
        s = -jnp.sort(-jnp.abs(params["sigma"][t]), axis=-1)
        u, v = params["U"][0], params["V"][0]
        koop = jnp.einsum("ij,mj,kj->mik", u, s, v)        # U diag(s) V^T
        koops.append(koop)
        outs.append(jnp.einsum("bmtd,med->bmte", obs, koop))
    states_1 = jnp.concatenate(outs, axis=2)
    return fc(states_1, params["dec"]), obs, states_1, fc(obs, params["dec"]), koops


# ----------------------------------- main -------------------------------------
if __name__ == "__main__":
    key = jax.random.PRNGKey(0)
    k_x, k_p = jax.random.split(key)
    states_t_0 = jax.random.normal(
        k_x, (BATCH, M_DYNAMICS, SEQ, STATES_DIM), jnp.float32)
    params = init_params(k_p)

    out = midst_forward(states_t_0, params)
    jax.block_until_ready(out["predictions"])

    ref_pred, ref_obs, ref_s1, ref_rec, ref_koops = _reference_forward(
        states_t_0, params)
    assert jnp.allclose(out["predictions"], ref_pred, rtol=1e-4, atol=1e-4)
    assert jnp.allclose(out["other"]["states_0"], ref_obs, rtol=1e-4, atol=1e-4)
    assert jnp.allclose(out["other"]["states_1"], ref_s1, rtol=1e-4, atol=1e-4)
    assert jnp.allclose(out["other"]["reconstruction"], ref_rec,
                        rtol=1e-4, atol=1e-4)
    assert jnp.allclose(out["other"]["dynamics"][0], ref_koops[0],
                        rtol=1e-4, atol=1e-4)

    print("KERNEL_OK")
</pallas_src>

<mosaic_0001>
module attributes {stable_mosaic.version = 11 : i64} {
  func.func @_midst_fused_kernel(%arg0: memref<64x16xf32, #tpu.memory_space<vmem>>, %arg1: memref<16x64xf32, #tpu.memory_space<vmem>>, %arg2: memref<64x32xf32, #tpu.memory_space<vmem>>, %arg3: memref<32x32xf32, #tpu.memory_space<vmem>>, %arg4: memref<32x16xf32, #tpu.memory_space<vmem>>, %arg5: memref<16x32xf32, #tpu.memory_space<vmem>>, %arg6: memref<32x16xf32, #tpu.memory_space<vmem>>, %arg7: memref<32x32xf32, #tpu.memory_space<vmem>>, %arg8: memref<32x32xf32, #tpu.memory_space<vmem>>, %arg9: memref<4x32xf32, #tpu.memory_space<vmem>>, %arg10: memref<64x32xf32, #tpu.memory_space<vmem>>, %arg11: memref<64x32xf32, #tpu.memory_space<vmem>>, %arg12: memref<128x32xf32, #tpu.memory_space<vmem>>, %arg13: memref<128x16xf32, #tpu.memory_space<vmem>>) attributes {dimension_semantics = [], scalar_prefetch = 0 : i64, scratch_operands = 0 : i64, tpu.core_type = #tpu.core_type<tc>} {
    %c0 = arith.constant 0 : index
    %c0_0 = arith.constant 0 : index
    %0 = vector.load %arg0[%c0, %c0_0] : memref<64x16xf32, #tpu.memory_space<vmem>>, vector<64x16xf32>
    %c0_1 = arith.constant 0 : index
    %c0_2 = arith.constant 0 : index
    %1 = vector.load %arg1[%c0_1, %c0_2] : memref<16x64xf32, #tpu.memory_space<vmem>>, vector<16x64xf32>
    %cst = arith.constant dense<0.000000e+00> : vector<64x64xf32>
    %2 = tpu.matmul %0, %1, %cst {dimension_numbers = #tpu.dot_dimension_numbers<[1], [0], [0], [1], [0, 0, 1, 1], [], []>} : vector<64x16xf32>, vector<16x64xf32>, vector<64x64xf32> -> vector<64x64xf32>
    %cst_3 = arith.constant 0.000000e+00 : f32
    %3 = vector.broadcast %cst_3 : f32 to vector<64x64xf32>
    %4 = arith.maximumf %2, %3 : vector<64x64xf32>
    %c0_4 = arith.constant 0 : index
    %c0_5 = arith.constant 0 : index
    %5 = vector.load %arg2[%c0_4, %c0_5] : memref<64x32xf32, #tpu.memory_space<vmem>>, vector<64x32xf32>
    %cst_6 = arith.constant dense<0.000000e+00> : vector<64x32xf32>
    %6 = tpu.matmul %4, %5, %cst_6 {dimension_numbers = #tpu.dot_dimension_numbers<[1], [0], [0], [1], [0, 0, 1, 1], [], []>} : vector<64x64xf32>, vector<64x32xf32>, vector<64x32xf32> -> vector<64x32xf32>
    %cst_7 = arith.constant 0.000000e+00 : f32
    %7 = vector.broadcast %cst_7 : f32 to vector<64x32xf32>
    %8 = arith.maximumf %6, %7 : vector<64x32xf32>
    %c0_8 = arith.constant 0 : index
    %c0_9 = arith.constant 0 : index
    %9 = vector.load %arg3[%c0_8, %c0_9] : memref<32x32xf32, #tpu.memory_space<vmem>>, vector<32x32xf32>
    %cst_10 = arith.constant dense<0.000000e+00> : vector<64x32xf32>
    %10 = tpu.matmul %8, %9, %cst_10 {dimension_numbers = #tpu.dot_dimension_numbers<[1], [0], [0], [1], [0, 0, 1, 1], [], []>} : vector<64x32xf32>, vector<32x32xf32>, vector<64x32xf32> -> vector<64x32xf32>
    %c0_11 = arith.constant 0 : index
    %c0_12 = arith.constant 0 : index
    %11 = vector.load %arg10[%c0_11, %c0_12] : memref<64x32xf32, #tpu.memory_space<vmem>>, vector<64x32xf32>
    tpu.vector_store %arg10[%c0_11, %c0_12], %10 {strides = array<i32>} : memref<64x32xf32, #tpu.memory_space<vmem>>, vector<64x32xf32>,
    %c0_13 = arith.constant 0 : index
    %c0_14 = arith.constant 0 : index
    %12 = vector.load %arg7[%c0_13, %c0_14] : memref<32x32xf32, #tpu.memory_space<vmem>>, vector<32x32xf32>
    %c0_15 = arith.constant 0 : index
    %c0_16 = arith.constant 0 : index
    %13 = vector.load %arg8[%c0_15, %c0_16] : memref<32x32xf32, #tpu.memory_space<vmem>>, vector<32x32xf32>
    %c0_17 = arith.constant 0 : index
    %c0_18 = arith.constant 0 : index
    %14 = vector.load %arg9[%c0_17, %c0_18] : memref<4x32xf32, #tpu.memory_space<vmem>>, vector<4x32xf32>
    %15 = vector.extract_strided_slice %14 {offsets = [0, 0], sizes = [1, 32], strides = [1, 1]} : vector<4x32xf32> to vector<1x32xf32>
    %16 = vector.broadcast %15 : vector<1x32xf32> to vector<32x32xf32>
    %17 = arith.mulf %12, %16 : vector<32x32xf32>
    %18 = vector.extract_strided_slice %14 {offsets = [1, 0], sizes = [1, 32], strides = [1, 1]} : vector<4x32xf32> to vector<1x32xf32>
    %19 = vector.broadcast %18 : vector<1x32xf32> to vector<32x32xf32>
    %20 = arith.mulf %12, %19 : vector<32x32xf32>
    %21 = vector.extract_strided_slice %14 {offsets = [2, 0], sizes = [1, 32], strides = [1, 1]} : vector<4x32xf32> to vector<1x32xf32>
    %22 = vector.broadcast %21 : vector<1x32xf32> to vector<32x32xf32>
    %23 = arith.mulf %12, %22 : vector<32x32xf32>
    %24 = vector.extract_strided_slice %14 {offsets = [3, 0], sizes = [1, 32], strides = [1, 1]} : vector<4x32xf32> to vector<1x32xf32>
    %25 = vector.broadcast %24 : vector<1x32xf32> to vector<32x32xf32>
    %26 = arith.mulf %12, %25 : vector<32x32xf32>
    %27 = tpu.concatenate %17, %20, %23, %26 in 0 : vector<32x32xf32>, vector<32x32xf32>, vector<32x32xf32>, vector<32x32xf32> -> vector<128x32xf32>
    %cst_19 = arith.constant dense<0.000000e+00> : vector<128x32xf32>
    %28 = tpu.matmul %27, %13, %cst_19 {dimension_numbers = #tpu.dot_dimension_numbers<[1], [1], [0], [0], [0, 0, 1, 0], [], []>} : vector<128x32xf32>, vector<32x32xf32>, vector<128x32xf32> -> vector<128x32xf32>
    %c0_20 = arith.constant 0 : index
    %c0_21 = arith.constant 0 : index
    %29 = vector.load %arg12[%c0_20, %c0_21] : memref<128x32xf32, #tpu.memory_space<vmem>>, vector<128x32xf32>
    tpu.vector_store %arg12[%c0_20, %c0_21], %28 {strides = array<i32>} : memref<128x32xf32, #tpu.memory_space<vmem>>, vector<128x32xf32>,
    %30 = vector.extract_strided_slice %10 {offsets = [0, 0], sizes = [8, 32], strides = [1, 1]} : vector<64x32xf32> to vector<8x32xf32>
    %31 = vector.extract_strided_slice %10 {offsets = [32, 0], sizes = [8, 32], strides = [1, 1]} : vector<64x32xf32> to vector<8x32xf32>
    %32 = tpu.concatenate %30, %31 in 0 : vector<8x32xf32>, vector<8x32xf32> -> vector<16x32xf32>
    %33 = vector.extract_strided_slice %28 {offsets = [0, 0], sizes = [32, 32], strides = [1, 1]} : vector<128x32xf32> to vector<32x32xf32>
    %cst_22 = arith.constant dense<0.000000e+00> : vector<16x32xf32>
    %34 = tpu.matmul %32, %33, %cst_22 {dimension_numbers = #tpu.dot_dimension_numbers<[1], [1], [0], [0], [0, 0, 1, 0], [], []>} : vector<16x32xf32>, vector<32x32xf32>, vector<16x32xf32> -> vector<16x32xf32>
    %35 = vector.extract_strided_slice %10 {offsets = [8, 0], sizes = [8, 32], strides = [1, 1]} : vector<64x32xf32> to vector<8x32xf32>
    %36 = vector.extract_strided_slice %10 {offsets = [40, 0], sizes = [8, 32], strides = [1, 1]} : vector<64x32xf32> to vector<8x32xf32>
    %37 = tpu.concatenate %35, %36 in 0 : vector<8x32xf32>, vector<8x32xf32> -> vector<16x32xf32>
    %38 = vector.extract_strided_slice %28 {offsets = [32, 0], sizes = [32, 32], strides = [1, 1]} : vector<128x32xf32> to vector<32x32xf32>
    %cst_23 = arith.constant dense<0.000000e+00> : vector<16x32xf32>
    %39 = tpu.matmul %37, %38, %cst_23 {dimension_numbers = #tpu.dot_dimension_numbers<[1], [1], [0], [0], [0, 0, 1, 0], [], []>} : vector<16x32xf32>, vector<32x32xf32>, vector<16x32xf32> -> vector<16x32xf32>
    %40 = vector.extract_strided_slice %10 {offsets = [16, 0], sizes = [8, 32], strides = [1, 1]} : vector<64x32xf32> to vector<8x32xf32>
    %41 = vector.extract_strided_slice %10 {offsets = [48, 0], sizes = [8, 32], strides = [1, 1]} : vector<64x32xf32> to vector<8x32xf32>
    %42 = tpu.concatenate %40, %41 in 0 : vector<8x32xf32>, vector<8x32xf32> -> vector<16x32xf32>
    %43 = vector.extract_strided_slice %28 {offsets = [64, 0], sizes = [32, 32], strides = [1, 1]} : vector<128x32xf32> to vector<32x32xf32>
    %cst_24 = arith.constant dense<0.000000e+00> : vector<16x32xf32>
    %44 = tpu.matmul %42, %43, %cst_24 {dimension_numbers = #tpu.dot_dimension_numbers<[1], [1], [0], [0], [0, 0, 1, 0], [], []>} : vector<16x32xf32>, vector<32x32xf32>, vector<16x32xf32> -> vector<16x32xf32>
    %45 = vector.extract_strided_slice %10 {offsets = [24, 0], sizes = [8, 32], strides = [1, 1]} : vector<64x32xf32> to vector<8x32xf32>
    %46 = vector.extract_strided_slice %10 {offsets = [56, 0], sizes = [8, 32], strides = [1, 1]} : vector<64x32xf32> to vector<8x32xf32>
    %47 = tpu.concatenate %45, %46 in 0 : vector<8x32xf32>, vector<8x32xf32> -> vector<16x32xf32>
    %48 = vector.extract_strided_slice %28 {offsets = [96, 0], sizes = [32, 32], strides = [1, 1]} : vector<128x32xf32> to vector<32x32xf32>
    %cst_25 = arith.constant dense<0.000000e+00> : vector<16x32xf32>
    %49 = tpu.matmul %47, %48, %cst_25 {dimension_numbers = #tpu.dot_dimension_numbers<[1], [1], [0], [0], [0, 0, 1, 0], [], []>} : vector<16x32xf32>, vector<32x32xf32>, vector<16x32xf32> -> vector<16x32xf32>
    %50 = vector.extract_strided_slice %34 {offsets = [0, 0], sizes = [8, 32], strides = [1, 1]} : vector<16x32xf32> to vector<8x32xf32>
    %51 = vector.extract_strided_slice %39 {offsets = [0, 0], sizes = [8, 32], strides = [1, 1]} : vector<16x32xf32> to vector<8x32xf32>
    %52 = vector.extract_strided_slice %44 {offsets = [0, 0], sizes = [8, 32], strides = [1, 1]} : vector<16x32xf32> to vector<8x32xf32>
    %53 = vector.extract_strided_slice %49 {offsets = [0, 0], sizes = [8, 32], strides = [1, 1]} : vector<16x32xf32> to vector<8x32xf32>
    %54 = vector.extract_strided_slice %34 {offsets = [8, 0], sizes = [8, 32], strides = [1, 1]} : vector<16x32xf32> to vector<8x32xf32>
    %55 = vector.extract_strided_slice %39 {offsets = [8, 0], sizes = [8, 32], strides = [1, 1]} : vector<16x32xf32> to vector<8x32xf32>
    %56 = vector.extract_strided_slice %44 {offsets = [8, 0], sizes = [8, 32], strides = [1, 1]} : vector<16x32xf32> to vector<8x32xf32>
    %57 = vector.extract_strided_slice %49 {offsets = [8, 0], sizes = [8, 32], strides = [1, 1]} : vector<16x32xf32> to vector<8x32xf32>
    %58 = tpu.concatenate %50, %51, %52, %53, %54, %55, %56, %57 in 0 : vector<8x32xf32>, vector<8x32xf32>, vector<8x32xf32>, vector<8x32xf32>, vector<8x32xf32>, vector<8x32xf32>, vector<8x32xf32>, vector<8x32xf32> -> vector<64x32xf32>
    %c0_26 = arith.constant 0 : index
    %c0_27 = arith.constant 0 : index
    %59 = vector.load %arg11[%c0_26, %c0_27] : memref<64x32xf32, #tpu.memory_space<vmem>>, vector<64x32xf32>
    tpu.vector_store %arg11[%c0_26, %c0_27], %58 {strides = array<i32>} : memref<64x32xf32, #tpu.memory_space<vmem>>, vector<64x32xf32>,
    %60 = tpu.concatenate %58, %10 in 0 : vector<64x32xf32>, vector<64x32xf32> -> vector<128x32xf32>
    %c0_28 = arith.constant 0 : index
    %c0_29 = arith.constant 0 : index
    %61 = vector.load %arg4[%c0_28, %c0_29] : memref<32x16xf32, #tpu.memory_space<vmem>>, vector<32x16xf32>
    %cst_30 = arith.constant dense<0.000000e+00> : vector<128x16xf32>
    %62 = tpu.matmul %60, %61, %cst_30 {dimension_numbers = #tpu.dot_dimension_numbers<[1], [0], [0], [1], [0, 0, 1, 1], [], []>} : vector<128x32xf32>, vector<32x16xf32>, vector<128x16xf32> -> vector<128x16xf32>
    %cst_31 = arith.constant 0.000000e+00 : f32
    %63 = vector.broadcast %cst_31 : f32 to vector<128x16xf32>
    %64 = arith.maximumf %62, %63 : vector<128x16xf32>
    %c0_32 = arith.constant 0 : index
    %c0_33 = arith.constant 0 : index
    %65 = vector.load %arg5[%c0_32, %c0_33] : memref<16x32xf32, #tpu.memory_space<vmem>>, vector<16x32xf32>
    %cst_34 = arith.constant dense<0.000000e+00> : vector<128x32xf32>
    %66 = tpu.matmul %64, %65, %cst_34 {dimension_numbers = #tpu.dot_dimension_numbers<[1], [0], [0], [1], [0, 0, 1, 1], [], []>} : vector<128x16xf32>, vector<16x32xf32>, vector<128x32xf32> -> vector<128x32xf32>
    %cst_35 = arith.constant 0.000000e+00 : f32
    %67 = vector.broadcast %cst_35 : f32 to vector<128x32xf32>
    %68 = arith.maximumf %66, %67 : vector<128x32xf32>
    %c0_36 = arith.constant 0 : index
    %c0_37 = arith.constant 0 : index
    %69 = vector.load %arg6[%c0_36, %c0_37] : memref<32x16xf32, #tpu.memory_space<vmem>>, vector<32x16xf32>
    %cst_38 = arith.constant dense<0.000000e+00> : vector<128x16xf32>
    %70 = tpu.matmul %68, %69, %cst_38 {dimension_numbers = #tpu.dot_dimension_numbers<[1], [0], [0], [1], [0, 0, 1, 1], [], []>} : vector<128x32xf32>, vector<32x16xf32>, vector<128x16xf32> -> vector<128x16xf32>
    %c0_39 = arith.constant 0 : index
    %c0_40 = arith.constant 0 : index
    %71 = vector.load %arg13[%c0_39, %c0_40] : memref<128x16xf32, #tpu.memory_space<vmem>>, vector<128x16xf32>
    tpu.vector_store %arg13[%c0_39, %c0_40], %70 {strides = array<i32>} : memref<128x16xf32, #tpu.memory_space<vmem>>, vector<128x16xf32>,
    return
  }
}

</mosaic_0001>

<llo_original>
// kernel: tpu_custom_call.1
$region0: #{tpu_custom_call.1}
  #allocation0 [shape = 'u32[]', space=smem, size = 0x4, offset = 0x4, fixed_abs, tag = 'smem constant byte address 0x4 - core index']
  #allocation1 [shape = 'u32[144,128]{1,0:T(1,128)}', space=vmem, size = 0x12000, scoped, tag = 'internal scratch']
  %s0 = inlined_call_operand.vmem [shape: f32[64,16], index: 0, kind: input, shape index: {}]
  %s1 = inlined_call_operand.vmem [shape: f32[16,64], index: 1, kind: input, shape index: {}]
  %s2 = inlined_call_operand.vmem [shape: f32[64,32], index: 2, kind: input, shape index: {}]
  %s3 = inlined_call_operand.vmem [shape: f32[32,32], index: 3, kind: input, shape index: {}]
  %s4 = inlined_call_operand.vmem [shape: f32[32,16], index: 4, kind: input, shape index: {}]
  %s5 = inlined_call_operand.vmem [shape: f32[16,32], index: 5, kind: input, shape index: {}]
  %s6 = inlined_call_operand.vmem [shape: f32[32,16], index: 6, kind: input, shape index: {}]
  %s7 = inlined_call_operand.vmem [shape: f32[32,32], index: 7, kind: input, shape index: {}]
  %s8 = inlined_call_operand.vmem [shape: f32[32,32], index: 8, kind: input, shape index: {}]
  %s9 = inlined_call_operand.vmem [shape: f32[4,32], index: 9, kind: input, shape index: {}]
  %s10 = inlined_call_operand.vmem [shape: f32[64,32], index: 10, kind: output, shape index: {0}]
  %s11 = inlined_call_operand.vmem [shape: f32[64,32], index: 11, kind: output, shape index: {1}]
  %s12 = inlined_call_operand.vmem [shape: f32[128,32], index: 12, kind: output, shape index: {2}]
  %s13 = inlined_call_operand.vmem [shape: f32[128,16], index: 13, kind: output, shape index: {3}]
  %14 = xla_tuple %s10, %s11, %s12, %s13
  %s15 = sld [smem:[#allocation0]]
  $region74: #{tpu_custom_call.1} parent=0
    _
  %s17 = ssub.s32 1, %s15
  %s18 = scalar_select 0, %s17, %s15
  // Predicated region
  $region2: #{tpu_custom_call.1} parent=0 // pred_check
    _
  $region3: #{tpu_custom_call.1} parent=0 // pred_check_branch
    %20 = sbr.rel (0) target = $region5
  $region4: #{tpu_custom_call.1} parent=0 // pred_region
    _
  $region5: #{tpu_custom_call.1} parent=0 // pred_fallthru
    _
  // Predicated region
  $region6: #{tpu_custom_call.1} parent=0 // pred_check
    _
  $region7: #{tpu_custom_call.1} parent=0 // pred_check_branch
    %22 = sbr.rel (0) target = $region9
  $region8: #{tpu_custom_call.1} parent=0 // pred_region
    _
  $region9: #{tpu_custom_call.1} parent=0 // pred_fallthru
    _
  // Predicated region
  $region10: #{tpu_custom_call.1} parent=0 // pred_check
    _
  $region11: #{tpu_custom_call.1} parent=0 // pred_check_branch
    %24 = sbr.rel (0) target = $region13
  $region12: #{tpu_custom_call.1} parent=0 // pred_region
    _
  $region13: #{tpu_custom_call.1} parent=0 // pred_fallthru
    _
  // Predicated region
  $region14: #{tpu_custom_call.1} parent=0 // pred_check
    _
  $region15: #{tpu_custom_call.1} parent=0 // pred_check_branch
    %26 = sbr.rel (0) target = $region17
  $region16: #{tpu_custom_call.1} parent=0 // pred_region
    _
  $region17: #{tpu_custom_call.1} parent=0 // pred_fallthru
    _
  // Predicated region
  $region18: #{tpu_custom_call.1} parent=0 // pred_check
    _
  $region19: #{tpu_custom_call.1} parent=0 // pred_check_branch
    %28 = sbr.rel (0) target = $region21
  $region20: #{tpu_custom_call.1} parent=0 // pred_region
    _
  $region21: #{tpu_custom_call.1} parent=0 // pred_fallthru
    _
  // Predicated region
  $region22: #{tpu_custom_call.1} parent=0 // pred_check
    _
  $region23: #{tpu_custom_call.1} parent=0 // pred_check_branch
    %30 = sbr.rel (0) target = $region25
  $region24: #{tpu_custom_call.1} parent=0 // pred_region
    _
  $region25: #{tpu_custom_call.1} parent=0 // pred_fallthru
    _
  // Predicated region
  $region26: #{tpu_custom_call.1} parent=0 // pred_check
    _
  $region27: #{tpu_custom_call.1} parent=0 // pred_check_branch
    %32 = sbr.rel (0) target = $region29
  $region28: #{tpu_custom_call.1} parent=0 // pred_region
    _
  $region29: #{tpu_custom_call.1} parent=0 // pred_fallthru
    _
  // Predicated region
  $region30: #{tpu_custom_call.1} parent=0 // pred_check
    _
  $region31: #{tpu_custom_call.1} parent=0 // pred_check_branch
    %34 = sbr.rel (0) target = $region33
  $region32: #{tpu_custom_call.1} parent=0 // pred_region
    _
  $region33: #{tpu_custom_call.1} parent=0 // pred_fallthru
    _
  // Predicated region
  $region34: #{tpu_custom_call.1} parent=0 // pred_check
    _
  $region35: #{tpu_custom_call.1} parent=0 // pred_check_branch
    %36 = sbr.rel (0) target = $region37
  $region36: #{tpu_custom_call.1} parent=0 // pred_region
    _
  $region37: #{tpu_custom_call.1} parent=0 // pred_fallthru
    _
  // Predicated region
  $region38: #{tpu_custom_call.1} parent=0 // pred_check
    _
  $region39: #{tpu_custom_call.1} parent=0 // pred_check_branch
    %38 = sbr.rel (0) target = $region41
  $region40: #{tpu_custom_call.1} parent=0 // pred_region
    _
  $region41: #{tpu_custom_call.1} parent=0 // pred_fallthru
    _
  %v39 = vld [vmem:[%s0] sm:$0xff]
  %v40 = vld [vmem:[%s0 + $0x8] sm:$0xff]
  %v41 = vld [vmem:[%s0 + $0x10] sm:$0xff]
  %v42 = vld [vmem:[%s0 + $0x18] sm:$0xff]
  %v43 = vld [vmem:[%s0 + $0x20] sm:$0xff]
  %v44 = vld [vmem:[%s0 + $0x28] sm:$0xff]
  %v45 = vld [vmem:[%s0 + $0x30] sm:$0xff]
  %v46 = vld [vmem:[%s0 + $0x38] sm:$0xff]
  %v47 = vld [vmem:[%s1] sm:$0xff]
  %v48 = vld [vmem:[%s1 + $0x8] sm:$0xff]
  %vm49 = vcmask 130048
  %v51 = vsel %vm49, %v39, 0
  %v54 = vsel %vm49, %v40, 0
  %v57 = vsel %vm49, %v41, 0
  %v60 = vsel %vm49, %v42, 0
  %v63 = vsel %vm49, %v43, 0
  %v66 = vsel %vm49, %v44, 0
  %v69 = vsel %vm49, %v45, 0
  %v72 = vsel %vm49, %v46, 0
  %74 = vmatprep.subr.mxu0 0.0
  %75 = vmatpush1.msra.mxu0 %v47
  %76 = vmatprep.subr.mxu0 0.0
  %77 = vmatpush1.msra.mxu0 %v48
  %78 = vmatprep.subr.mxu0 0.0
  %79 = vmatpush1.msra.mxu0 0.0
  %80 = vmatprep.subr.mxu0 0.0
  %81 = vmatpush1.msra.mxu0 0.0
  %82 = vmatprep.subr.mxu0 0.0
  %83 = vmatpush1.msra.mxu0 0.0
  %84 = vmatprep.subr.mxu0 0.0
  %85 = vmatpush1.msra.mxu0 0.0
  %86 = vmatprep.subr.mxu0 0.0
  %87 = vmatpush1.msra.mxu0 0.0
  %88 = vmatprep.subr.mxu0 0.0
  %89 = vmatpush1.msra.mxu0 0.0
  %90 = vmatprep.subr.mxu0 0.0
  %91 = vmatpush1.msra.mxu0 0.0
  %92 = vmatprep.subr.mxu0 0.0
  %93 = vmatpush1.msra.mxu0 0.0
  %94 = vmatprep.subr.mxu0 0.0
  %95 = vmatpush1.msra.mxu0 0.0
  %96 = vmatprep.subr.mxu0 0.0
  %97 = vmatpush1.msra.mxu0 0.0
  %98 = vmatprep.subr.mxu0 0.0
  %99 = vmatpush1.msra.mxu0 0.0
  %100 = vmatprep.subr.mxu0 0.0
  %101 = vmatpush1.msra.mxu0 0.0
  %102 = vmatprep.subr.mxu0 0.0
  %103 = vmatpush1.msra.mxu0 0.0
  %104 = vmatprep.subr.mxu0 0.0
  %105 = vmatpush1.msra.mxu0 0.0
  %106 = vmatprep.subr.mxu0 0.0
  %107 = vmatpush1.msra.mxu0 0.0
  %108 = vmatprep.subr.mxu0 0.0
  %109 = vmatpush1.msra.mxu0 0.0
  %110 = vmatprep.subr.mxu0 0.0
  %111 = vmatpush1.msra.mxu0 0.0
  %112 = vmatprep.subr.mxu0 0.0
  %113 = vmatpush1.msra.mxu0 0.0
  %114 = vmatprep.subr.mxu0 0.0
  %115 = vmatpush1.msra.mxu0 0.0
  %116 = vmatprep.subr.mxu0 0.0
  %117 = vmatpush1.msra.mxu0 0.0
  %118 = vmatprep.subr.mxu0 0.0
  %119 = vmatpush1.msra.mxu0 0.0
  %120 = vmatprep.subr.mxu0 0.0
  %121 = vmatpush1.msra.mxu0 0.0
  %122 = vmatprep.subr.mxu0 0.0
  %123 = vmatpush1.msra.mxu0 0.0
  %124 = vmatprep.subr.mxu0 0.0
  %125 = vmatpush1.msra.mxu0 0.0
  %126 = vmatprep.subr.mxu0 0.0
  %127 = vmatpush1.msra.mxu0 0.0
  %128 = vmatprep.subr.mxu0 0.0
  %129 = vmatpush1.msra.mxu0 0.0
  %130 = vmatprep.subr.mxu0 0.0
  %131 = vmatpush1.msra.mxu0 0.0
  %132 = vmatprep.subr.mxu0 0.0
  %133 = vmatpush1.msra.mxu0 0.0
  %134 = vmatprep.subr.mxu0 0.0
  %135 = vmatpush1.msra.mxu0 0.0
  %136 = vmatprep.subr.mxu0 0.0
  %137 = vmatpush1.msra.mxu0 0.0
  %138 = vmatprep.mubr.f32.mxu0 0.0
  %139 = vmatmul.mubr.f32.gmra.mrb[0].mxu0 %v51
  %v140 = vpop.f32.mrb[0].mxu0
  %v141 = vadd.f32 0.0, %v140
  %v142 = vpop.f32.mrb[0].mxu0
  %143 = vmatprep.mubr.f32.mxu0 0.0
  %144 = vmatmul.mubr.f32.gmra.mrb[0].mxu0 %v54
  %v145 = vpop.f32.mrb[0].mxu0
  %v146 = vadd.f32 0.0, %v145
  %v147 = vpop.f32.mrb[0].mxu0
  %148 = vmatprep.mubr.f32.mxu0 0.0
  %149 = vmatmul.mubr.f32.gmra.mrb[0].mxu0 %v57
  %v150 = vpop.f32.mrb[0].mxu0
  %v151 = vadd.f32 0.0, %v150
  %v152 = vpop.f32.mrb[0].mxu0
  %153 = vmatprep.mubr.f32.mxu0 0.0
  %154 = vmatmul.mubr.f32.gmra.mrb[0].mxu0 %v60
  %v155 = vpop.f32.mrb[0].mxu0
  %v156 = vadd.f32 0.0, %v155
  %v157 = vpop.f32.mrb[0].mxu0
  %158 = vmatprep.mubr.f32.mxu0 0.0
  %159 = vmatmul.mubr.f32.gmra.mrb[0].mxu0 %v63
  %v160 = vpop.f32.mrb[0].mxu0
  %v161 = vadd.f32 0.0, %v160
  %v162 = vpop.f32.mrb[0].mxu0
  %163 = vmatprep.mubr.f32.mxu0 0.0
  %164 = vmatmul.mubr.f32.gmra.mrb[0].mxu0 %v66
  %v165 = vpop.f32.mrb[0].mxu0
  %v166 = vadd.f32 0.0, %v165
  %v167 = vpop.f32.mrb[0].mxu0
  %168 = vmatprep.mubr.f32.mxu0 0.0
  %169 = vmatmul.mubr.f32.gmra.mrb[0].mxu0 %v69
  %v170 = vpop.f32.mrb[0].mxu0
  %v171 = vadd.f32 0.0, %v170
  %v172 = vpop.f32.mrb[0].mxu0
  %173 = vmatprep.mubr.f32.mxu0 0.0
  %174 = vmatmul.mubr.f32.gmra.mrb[0].mxu0 %v72
  %v175 = vpop.f32.mrb[0].mxu0
  %v176 = vadd.f32 0.0, %v175
  %v177 = vpop.f32.mrb[0].mxu0
  %178 = vdwg.mxu0
  %v179 = vmax.f32 %v141, 0.0
  %v180 = vmax.f32 %v146, 0.0
  %v181 = vmax.f32 %v151, 0.0
  %v182 = vmax.f32 %v156, 0.0
  %v183 = vmax.f32 %v161, 0.0
  %v184 = vmax.f32 %v166, 0.0
  %v185 = vmax.f32 %v171, 0.0
  %v186 = vmax.f32 %v176, 0.0
  %v187 = vld [vmem:[%s2] sm:$0xff]
  %v188 = vld [vmem:[%s2 + $0x8] sm:$0xff]
  %v189 = vld [vmem:[%s2 + $0x10] sm:$0xff]
  %v190 = vld [vmem:[%s2 + $0x18] sm:$0xff]
  %v191 = vld [vmem:[%s2 + $0x20] sm:$0xff]
  %v192 = vld [vmem:[%s2 + $0x28] sm:$0xff]
  %v193 = vld [vmem:[%s2 + $0x30] sm:$0xff]
  %v194 = vld [vmem:[%s2 + $0x38] sm:$0xff]
  %vm195 = vcmask 523264
  %v197 = vsel %vm195, %v179, 0
  %v200 = vsel %vm195, %v180, 0
  %v203 = vsel %vm195, %v181, 0
  %v206 = vsel %vm195, %v182, 0
  %v209 = vsel %vm195, %v183, 0
  %v212 = vsel %vm195, %v184, 0
  %v215 = vsel %vm195, %v185, 0
  %v218 = vsel %vm195, %v186, 0
  %220 = vmatprep.subr.mxu0 0.0
  %221 = vmatpush1.msra.mxu0 %v187
  %222 = vmatprep.subr.mxu0 0.0
  %223 = vmatpush1.msra.mxu0 %v188
  %224 = vmatprep.subr.mxu0 0.0
  %225 = vmatpush1.msra.mxu0 %v189
  %226 = vmatprep.subr.mxu0 0.0
  %227 = vmatpush1.msra.mxu0 %v190
  %228 = vmatprep.subr.mxu0 0.0
  %229 = vmatpush1.msra.mxu0 %v191
  %230 = vmatprep.subr.mxu0 0.0
  %231 = vmatpush1.msra.mxu0 %v192
  %232 = vmatprep.subr.mxu0 0.0
  %233 = vmatpush1.msra.mxu0 %v193
  %234 = vmatprep.subr.mxu0 0.0
  %235 = vmatpush1.msra.mxu0 %v194
  %236 = vmatprep.subr.mxu0 0.0
  %237 = vmatpush1.msra.mxu0 0.0
  %238 = vmatprep.subr.mxu0 0.0
  %239 = vmatpush1.msra.mxu0 0.0
  %240 = vmatprep.subr.mxu0 0.0
  %241 = vmatpush1.msra.mxu0 0.0
  %242 = vmatprep.subr.mxu0 0.0
  %243 = vmatpush1.msra.mxu0 0.0
  %244 = vmatprep.subr.mxu0 0.0
  %245 = vmatpush1.msra.mxu0 0.0
  %246 = vmatprep.subr.mxu0 0.0
  %247 = vmatpush1.msra.mxu0 0.0
  %248 = vmatprep.subr.mxu0 0.0
  %249 = vmatpush1.msra.mxu0 0.0
  %250 = vmatprep.subr.mxu0 0.0
  %251 = vmatpush1.msra.mxu0 0.0
  %252 = vmatprep.subr.mxu0 0.0
  %253 = vmatpush1.msra.mxu0 0.0
  %254 = vmatprep.subr.mxu0 0.0
  %255 = vmatpush1.msra.mxu0 0.0
  %256 = vmatprep.subr.mxu0 0.0
  %257 = vmatpush1.msra.mxu0 0.0
  %258 = vmatprep.subr.mxu0 0.0
  %259 = vmatpush1.msra.mxu0 0.0
  %260 = vmatprep.subr.mxu0 0.0
  %261 = vmatpush1.msra.mxu0 0.0
  %262 = vmatprep.subr.mxu0 0.0
  %263 = vmatpush1.msra.mxu0 0.0
  %264 = vmatprep.subr.mxu0 0.0
  %265 = vmatpush1.msra.mxu0 0.0
  %266 = vmatprep.subr.mxu0 0.0
  %267 = vmatpush1.msra.mxu0 0.0
  %268 = vmatprep.subr.mxu0 0.0
  %269 = vmatpush1.msra.mxu0 0.0
  %270 = vmatprep.subr.mxu0 0.0
  %271 = vmatpush1.msra.mxu0 0.0
  %272 = vmatprep.subr.mxu0 0.0
  %273 = vmatpush1.msra.mxu0 0.0
  %274 = vmatprep.subr.mxu0 0.0
  %275 = vmatpush1.msra.mxu0 0.0
  %276 = vmatprep.subr.mxu0 0.0
  %277 = vmatpush1.msra.mxu0 0.0
  %278 = vmatprep.subr.mxu0 0.0
  %279 = vmatpush1.msra.mxu0 0.0
  %280 = vmatprep.subr.mxu0 0.0
  %281 = vmatpush1.msra.mxu0 0.0
  %282 = vmatprep.subr.mxu0 0.0
  %283 = vmatpush1.msra.mxu0 0.0
  %284 = vmatprep.mubr.f32.mxu0 0.0
  %285 = vmatmul.mubr.f32.gmra.mrb[0].mxu0 %v197
  %v286 = vpop.f32.mrb[0].mxu0
  %v287 = vadd.f32 0.0, %v286
  %v288 = vpop.f32.mrb[0].mxu0
  %289 = vmatprep.mubr.f32.mxu0 0.0
  %290 = vmatmul.mubr.f32.gmra.mrb[0].mxu0 %v200
  %v291 = vpop.f32.mrb[0].mxu0
  %v292 = vadd.f32 0.0, %v291
  %v293 = vpop.f32.mrb[0].mxu0
  %294 = vmatprep.mubr.f32.mxu0 0.0
  %295 = vmatmul.mubr.f32.gmra.mrb[0].mxu0 %v203
  %v296 = vpop.f32.mrb[0].mxu0
  %v297 = vadd.f32 0.0, %v296
  %v298 = vpop.f32.mrb[0].mxu0
  %299 = vmatprep.mubr.f32.mxu0 0.0
  %300 = vmatmul.mubr.f32.gmra.mrb[0].mxu0 %v206
  %v301 = vpop.f32.mrb[0].mxu0
  %v302 = vadd.f32 0.0, %v301
  %v303 = vpop.f32.mrb[0].mxu0
  %304 = vmatprep.mubr.f32.mxu0 0.0
  %305 = vmatmul.mubr.f32.gmra.mrb[0].mxu0 %v209
  %v306 = vpop.f32.mrb[0].mxu0
  %v307 = vadd.f32 0.0, %v306
  %v308 = vpop.f32.mrb[0].mxu0
  %309 = vmatprep.mubr.f32.mxu0 0.0
  %310 = vmatmul.mubr.f32.gmra.mrb[0].mxu0 %v212
  %v311 = vpop.f32.mrb[0].mxu0
  %v312 = vadd.f32 0.0, %v311
  %v313 = vpop.f32.mrb[0].mxu0
  %314 = vmatprep.mubr.f32.mxu0 0.0
  %315 = vmatmul.mubr.f32.gmra.mrb[0].mxu0 %v215
  %v316 = vpop.f32.mrb[0].mxu0
  %v317 = vadd.f32 0.0, %v316
  %v318 = vpop.f32.mrb[0].mxu0
  %319 = vmatprep.mubr.f32.mxu0 0.0
  %320 = vmatmul.mubr.f32.gmra.mrb[0].mxu0 %v218
  %v321 = vpop.f32.mrb[0].mxu0
  %v322 = vadd.f32 0.0, %v321
  %v323 = vpop.f32.mrb[0].mxu0
  %324 = vdwg.mxu0
  %v325 = vmax.f32 %v287, 0.0
  %v326 = vmax.f32 %v292, 0.0
  %v327 = vmax.f32 %v297, 0.0
  %v328 = vmax.f32 %v302, 0.0
  %v329 = vmax.f32 %v307, 0.0
  %v330 = vmax.f32 %v312, 0.0
  %v331 = vmax.f32 %v317, 0.0
  %v332 = vmax.f32 %v322, 0.0
  %v333 = vld [vmem:[%s3] sm:$0xff]
  %v334 = vld [vmem:[%s3 + $0x8] sm:$0xff]
  %v335 = vld [vmem:[%s3 + $0x10] sm:$0xff]
  %v336 = vld [vmem:[%s3 + $0x18] sm:$0xff]
  %vm337 = vcmask 261120
  %v339 = vsel %vm337, %v325, 0
  %v342 = vsel %vm337, %v326, 0
  %v345 = vsel %vm337, %v327, 0
  %v348 = vsel %vm337, %v328, 0
  %v351 = vsel %vm337, %v329, 0
  %v354 = vsel %vm337, %v330, 0
  %v357 = vsel %vm337, %v331, 0
  %v360 = vsel %vm337, %v332, 0
  %362 = vmatprep.subr.mxu0 0.0
  %363 = vmatpush1.msra.mxu0 %v333
  %364 = vmatprep.subr.mxu0 0.0
  %365 = vmatpush1.msra.mxu0 %v334
  %366 = vmatprep.subr.mxu0 0.0
  %367 = vmatpush1.msra.mxu0 %v335
  %368 = vmatprep.subr.mxu0 0.0
  %369 = vmatpush1.msra.mxu0 %v336
  %370 = vmatprep.subr.mxu0 0.0
  %371 = vmatpush1.msra.mxu0 0.0
  %372 = vmatprep.subr.mxu0 0.0
  %373 = vmatpush1.msra.mxu0 0.0
  %374 = vmatprep.subr.mxu0 0.0
  %375 = vmatpush1.msra.mxu0 0.0
  %376 = vmatprep.subr.mxu0 0.0
  %377 = vmatpush1.msra.mxu0 0.0
  %378 = vmatprep.subr.mxu0 0.0
  %379 = vmatpush1.msra.mxu0 0.0
  %380 = vmatprep.subr.mxu0 0.0
  %381 = vmatpush1.msra.mxu0 0.0
  %382 = vmatprep.subr.mxu0 0.0
  %383 = vmatpush1.msra.mxu0 0.0
  %384 = vmatprep.subr.mxu0 0.0
  %385 = vmatpush1.msra.mxu0 0.0
  %386 = vmatprep.subr.mxu0 0.0
  %387 = vmatpush1.msra.mxu0 0.0
  %388 = vmatprep.subr.mxu0 0.0
  %389 = vmatpush1.msra.mxu0 0.0
  %390 = vmatprep.subr.mxu0 0.0
  %391 = vmatpush1.msra.mxu0 0.0
  %392 = vmatprep.subr.mxu0 0.0
  %393 = vmatpush1.msra.mxu0 0.0
  %394 = vmatprep.subr.mxu0 0.0
  %395 = vmatpush1.msra.mxu0 0.0
  %396 = vmatprep.subr.mxu0 0.0
  %397 = vmatpush1.msra.mxu0 0.0
  %398 = vmatprep.subr.mxu0 0.0
  %399 = vmatpush1.msra.mxu0 0.0
  %400 = vmatprep.subr.mxu0 0.0
  %401 = vmatpush1.msra.mxu0 0.0
  %402 = vmatprep.subr.mxu0 0.0
  %403 = vmatpush1.msra.mxu0 0.0
  %404 = vmatprep.subr.mxu0 0.0
  %405 = vmatpush1.msra.mxu0 0.0
  %406 = vmatprep.subr.mxu0 0.0
  %407 = vmatpush1.msra.mxu0 0.0
  %408 = vmatprep.subr.mxu0 0.0
  %409 = vmatpush1.msra.mxu0 0.0
  %410 = vmatprep.subr.mxu0 0.0
  %411 = vmatpush1.msra.mxu0 0.0
  %412 = vmatprep.subr.mxu0 0.0
  %413 = vmatpush1.msra.mxu0 0.0
  %414 = vmatprep.subr.mxu0 0.0
  %415 = vmatpush1.msra.mxu0 0.0
  %416 = vmatprep.subr.mxu0 0.0
  %417 = vmatpush1.msra.mxu0 0.0
  %418 = vmatprep.subr.mxu0 0.0
  %419 = vmatpush1.msra.mxu0 0.0
  %420 = vmatprep.subr.mxu0 0.0
  %421 = vmatpush1.msra.mxu0 0.0
  %422 = vmatprep.subr.mxu0 0.0
  %423 = vmatpush1.msra.mxu0 0.0
  %424 = vmatprep.subr.mxu0 0.0
  %425 = vmatpush1.msra.mxu0 0.0
  %426 = vmatprep.mubr.f32.mxu0 0.0
  %427 = vmatmul.mubr.f32.gmra.mrb[0].mxu0 %v339
  %v428 = vpop.f32.mrb[0].mxu0
  %v429 = vadd.f32 0.0, %v428
  %v430 = vpop.f32.mrb[0].mxu0
  %431 = vmatprep.mubr.f32.mxu0 0.0
  %432 = vmatmul.mubr.f32.gmra.mrb[0].mxu0 %v342
  %v433 = vpop.f32.mrb[0].mxu0
  %v434 = vadd.f32 0.0, %v433
  %v435 = vpop.f32.mrb[0].mxu0
  %436 = vmatprep.mubr.f32.mxu0 0.0
  %437 = vmatmul.mubr.f32.gmra.mrb[0].mxu0 %v345
  %v438 = vpop.f32.mrb[0].mxu0
  %v439 = vadd.f32 0.0, %v438
  %v440 = vpop.f32.mrb[0].mxu0
  %441 = vmatprep.mubr.f32.mxu0 0.0
  %442 = vmatmul.mubr.f32.gmra.mrb[0].mxu0 %v348
  %v443 = vpop.f32.mrb[0].mxu0
  %v444 = vadd.f32 0.0, %v443
  %v445 = vpop.f32.mrb[0].mxu0
  %446 = vmatprep.mubr.f32.mxu0 0.0
  %447 = vmatmul.mubr.f32.gmra.mrb[0].mxu0 %v351
  %v448 = vpop.f32.mrb[0].mxu0
  %v449 = vadd.f32 0.0, %v448
  %v450 = vpop.f32.mrb[0].mxu0
  %451 = vmatprep.mubr.f32.mxu0 0.0
  %452 = vmatmul.mubr.f32.gmra.mrb[0].mxu0 %v354
  %v453 = vpop.f32.mrb[0].mxu0
  %v454 = vadd.f32 0.0, %v453
  %v455 = vpop.f32.mrb[0].mxu0
  %456 = vmatprep.mubr.f32.mxu0 0.0
  %457 = vmatmul.mubr.f32.gmra.mrb[0].mxu0 %v357
  %v458 = vpop.f32.mrb[0].mxu0
  %v459 = vadd.f32 0.0, %v458
  %v460 = vpop.f32.mrb[0].mxu0
  %461 = vmatprep.mubr.f32.mxu0 0.0
  %462 = vmatmul.mubr.f32.gmra.mrb[0].mxu0 %v360
  %v463 = vpop.f32.mrb[0].mxu0
  %v464 = vadd.f32 0.0, %v463
  %v465 = vpop.f32.mrb[0].mxu0
  %466 = vdwg.mxu0
  %467 = vst.msk [vmem:[%s10] sm:$0xff] %vm337, %v429
  %468 = vst.msk [vmem:[%s10 + $0x8] sm:$0xff] %vm337, %v434
  %469 = vst.msk [vmem:[%s10 + $0x10] sm:$0xff] %vm337, %v439
  %470 = vst.msk [vmem:[%s10 + $0x18] sm:$0xff] %vm337, %v444
  %471 = vst.msk [vmem:[%s10 + $0x20] sm:$0xff] %vm337, %v449
  %472 = vst.msk [vmem:[%s10 + $0x28] sm:$0xff] %vm337, %v454
  %473 = vst.msk [vmem:[%s10 + $0x30] sm:$0xff] %vm337, %v459
  %474 = vst.msk [vmem:[%s10 + $0x38] sm:$0xff] %vm337, %v464
  %v475 = vld [vmem:[%s7] sm:$0xff]
  %v476 = vld [vmem:[%s7 + $0x8] sm:$0xff]
  %v477 = vld [vmem:[%s7 + $0x10] sm:$0xff]
  %v478 = vld [vmem:[%s7 + $0x18] sm:$0xff]
  %v479 = vld [vmem:[%s8] sm:$0xff]
  %v480 = vld [vmem:[%s8 + $0x8] sm:$0xff]
  %v481 = vld [vmem:[%s8 + $0x10] sm:$0xff]
  %v482 = vld [vmem:[%s8 + $0x18] sm:$0xff]
  %v483 = vld [vmem:[%s9] sm:$0xf]
  %v484 = vlaneseq
  %v485 = vshrl.u32 %v484, 7
  %v486 = vsub.s32 0, %v485
  %v487 = vrot.slane %v483, %v486
  %v488 = vmul.f32 %v475, %v487
  %v489 = vmul.f32 %v476, %v487
  %v490 = vmul.f32 %v477, %v487
  %v491 = vmul.f32 %v478, %v487
  %v492 = vlaneseq
  %v493 = vshrl.u32 %v492, 7
  %v494 = vsub.s32 1, %v493
  %v495 = vrot.slane %v483, %v494
  %v496 = vmul.f32 %v475, %v495
  %v497 = vmul.f32 %v476, %v495
  %v498 = vmul.f32 %v477, %v495
  %v499 = vmul.f32 %v478, %v495
  %v500 = vlaneseq
  %v501 = vshrl.u32 %v500, 7
  %v502 = vsub.s32 2, %v501
  %v503 = vrot.slane %v483, %v502
  %v504 = vmul.f32 %v475, %v503
  %v505 = vmul.f32 %v476, %v503
  %v506 = vmul.f32 %v477, %v503
  %v507 = vmul.f32 %v478, %v503
  %v508 = vlaneseq
  %v509 = vshrl.u32 %v508, 7
  %v510 = vsub.s32 3, %v509
  %v511 = vrot.slane %v483, %v510
  %v512 = vmul.f32 %v475, %v511
  %v513 = vmul.f32 %v476, %v511
  %v514 = vmul.f32 %v477, %v511
  %v515 = vmul.f32 %v478, %v511
  %v517 = vsel %vm337, %v488, 0
  %v520 = vsel %vm337, %v489, 0
  %v523 = vsel %vm337, %v490, 0
  %v526 = vsel %vm337, %v491, 0
  %v529 = vsel %vm337, %v496, 0
  %v532 = vsel %vm337, %v497, 0
  %v535 = vsel %vm337, %v498, 0
  %v538 = vsel %vm337, %v499, 0
  %v541 = vsel %vm337, %v504, 0
  %v544 = vsel %vm337, %v505, 0
  %v547 = vsel %vm337, %v506, 0
  %v550 = vsel %vm337, %v507, 0
  %v553 = vsel %vm337, %v512, 0
  %v556 = vsel %vm337, %v513, 0
  %v559 = vsel %vm337, %v514, 0
  %v562 = vsel %vm337, %v515, 0
  %v565 = vsel %vm337, %v479, 0
  %v568 = vsel %vm337, %v480, 0
  %v571 = vsel %vm337, %v481, 0
  %v574 = vsel %vm337, %v482, 0
  %576 = vmatprep.subr.mxu0 0.0
  %577 = vmatpush1.xpose.msra.mxu0 %v565
  %578 = vmatprep.subr.mxu0 0.0
  %579 = vmatpush1.xpose.msra.mxu0 %v568
  %580 = vmatprep.subr.mxu0 0.0
  %581 = vmatpush1.xpose.msra.mxu0 %v571
  %582 = vmatprep.subr.mxu0 0.0
  %583 = vmatpush1.xpose.msra.mxu0 %v574
  %584 = vmatprep.subr.mxu0 0.0
  %585 = vmatpush1.xpose.msra.mxu0 0.0
  %586 = vmatprep.subr.mxu0 0.0
  %587 = vmatpush1.xpose.msra.mxu0 0.0
  %588 = vmatprep.subr.mxu0 0.0
  %589 = vmatpush1.xpose.msra.mxu0 0.0
  %590 = vmatprep.subr.mxu0 0.0
  %591 = vmatpush1.xpose.msra.mxu0 0.0
  %592 = vmatprep.subr.mxu0 0.0
  %593 = vmatpush1.xpose.msra.mxu0 0.0
  %594 = vmatprep.subr.mxu0 0.0
  %595 = vmatpush1.xpose.msra.mxu0 0.0
  %596 = vmatprep.subr.mxu0 0.0
  %597 = vmatpush1.xpose.msra.mxu0 0.0
  %598 = vmatprep.subr.mxu0 0.0
  %599 = vmatpush1.xpose.msra.mxu0 0.0
  %600 = vmatprep.subr.mxu0 0.0
  %601 = vmatpush1.xpose.msra.mxu0 0.0
  %602 = vmatprep.subr.mxu0 0.0
  %603 = vmatpush1.xpose.msra.mxu0 0.0
  %604 = vmatprep.subr.mxu0 0.0
  %605 = vmatpush1.xpose.msra.mxu0 0.0
  %606 = vmatprep.subr.mxu0 0.0
  %607 = vmatpush1.xpose.msra.mxu0 0.0
  %608 = vmatprep.subr.mxu0 0.0
  %609 = vmatpush1.xpose.msra.mxu0 0.0
  %610 = vmatprep.subr.mxu0 0.0
  %611 = vmatpush1.xpose.msra.mxu0 0.0
  %612 = vmatprep.subr.mxu0 0.0
  %613 = vmatpush1.xpose.msra.mxu0 0.0
  %614 = vmatprep.subr.mxu0 0.0
  %615 = vmatpush1.xpose.msra.mxu0 0.0
  %616 = vmatprep.subr.mxu0 0.0
  %617 = vmatpush1.xpose.msra.mxu0 0.0
  %618 = vmatprep.subr.mxu0 0.0
  %619 = vmatpush1.xpose.msra.mxu0 0.0
  %620 = vmatprep.subr.mxu0 0.0
  %621 = vmatpush1.xpose.msra.mxu0 0.0
  %622 = vmatprep.subr.mxu0 0.0
  %623 = vmatpush1.xpose.msra.mxu0 0.0
  %624 = vmatprep.subr.mxu0 0.0
  %625 = vmatpush1.xpose.msra.mxu0 0.0
  %626 = vmatprep.subr.mxu0 0.0
  %627 = vmatpush1.xpose.msra.mxu0 0.0
  %628 = vmatprep.subr.mxu0 0.0
  %629 = vmatpush1.xpose.msra.mxu0 0.0
  %630 = vmatprep.subr.mxu0 0.0
  %631 = vmatpush1.xpose.msra.mxu0 0.0
  %632 = vmatprep.subr.mxu0 0.0
  %633 = vmatpush1.xpose.msra.mxu0 0.0
  %634 = vmatprep.subr.mxu0 0.0
  %635 = vmatpush1.xpose.msra.mxu0 0.0
  %636 = vmatprep.subr.mxu0 0.0
  %637 = vmatpush1.xpose.msra.mxu0 0.0
  %638 = vmatprep.subr.mxu0 0.0
  %639 = vmatpush1.xpose.msra.mxu0 0.0
  %640 = vmatprep.mubr.f32.mxu0 0.0
  %641 = vmatmul.mubr.f32.gmra.mrb[0].mxu0 %v517
  %v642 = vpop.f32.mrb[0].mxu0
  %v643 = vadd.f32 0.0, %v642
  %v644 = vpop.f32.mrb[0].mxu0
  %645 = vmatprep.mubr.f32.mxu0 0.0
  %646 = vmatmul.mubr.f32.gmra.mrb[0].mxu0 %v520
  %v647 = vpop.f32.mrb[0].mxu0
  %v648 = vadd.f32 0.0, %v647
  %v649 = vpop.f32.mrb[0].mxu0
  %650 = vmatprep.mubr.f32.mxu0 0.0
  %651 = vmatmul.mubr.f32.gmra.mrb[0].mxu0 %v523
  %v652 = vpop.f32.mrb[0].mxu0
  %v653 = vadd.f32 0.0, %v652
  %v654 = vpop.f32.mrb[0].mxu0
  %655 = vmatprep.mubr.f32.mxu0 0.0
  %656 = vmatmul.mubr.f32.gmra.mrb[0].mxu0 %v526
  %v657 = vpop.f32.mrb[0].mxu0
  %v658 = vadd.f32 0.0, %v657
  %v659 = vpop.f32.mrb[0].mxu0
  %660 = vmatprep.mubr.f32.mxu0 0.0
  %661 = vmatmul.mubr.f32.gmra.mrb[0].mxu0 %v529
  %v662 = vpop.f32.mrb[0].mxu0
  %v663 = vadd.f32 0.0, %v662
  %v664 = vpop.f32.mrb[0].mxu0
  %665 = vmatprep.mubr.f32.mxu0 0.0
  %666 = vmatmul.mubr.f32.gmra.mrb[0].mxu0 %v532
  %v667 = vpop.f32.mrb[0].mxu0
  %v668 = vadd.f32 0.0, %v667
  %v669 = vpop.f32.mrb[0].mxu0
  %670 = vmatprep.mubr.f32.mxu0 0.0
  %671 = vmatmul.mubr.f32.gmra.mrb[0].mxu0 %v535
  %v672 = vpop.f32.mrb[0].mxu0
  %v673 = vadd.f32 0.0, %v672
  %v674 = vpop.f32.mrb[0].mxu0
  %675 = vmatprep.mubr.f32.mxu0 0.0
  %676 = vmatmul.mubr.f32.gmra.mrb[0].mxu0 %v538
  %v677 = vpop.f32.mrb[0].mxu0
  %v678 = vadd.f32 0.0, %v677
  %v679 = vpop.f32.mrb[0].mxu0
  %680 = vmatprep.mubr.f32.mxu0 0.0
  %681 = vmatmul.mubr.f32.gmra.mrb[0].mxu0 %v541
  %v682 = vpop.f32.mrb[0].mxu0
  %v683 = vadd.f32 0.0, %v682
  %v684 = vpop.f32.mrb[0].mxu0
  %685 = vmatprep.mubr.f32.mxu0 0.0
  %686 = vmatmul.mubr.f32.gmra.mrb[0].mxu0 %v544
  %v687 = vpop.f32.mrb[0].mxu0
  %v688 = vadd.f32 0.0, %v687
  %v689 = vpop.f32.mrb[0].mxu0
  %690 = vmatprep.mubr.f32.mxu0 0.0
  %691 = vmatmul.mubr.f32.gmra.mrb[0].mxu0 %v547
  %v692 = vpop.f32.mrb[0].mxu0
  %v693 = vadd.f32 0.0, %v692
  %v694 = vpop.f32.mrb[0].mxu0
  %695 = vmatprep.mubr.f32.mxu0 0.0
  %696 = vmatmul.mubr.f32.gmra.mrb[0].mxu0 %v550
  %v697 = vpop.f32.mrb[0].mxu0
  %v698 = vadd.f32 0.0, %v697
  %v699 = vpop.f32.mrb[0].mxu0
  %700 = vmatprep.mubr.f32.mxu0 0.0
  %701 = vmatmul.mubr.f32.gmra.mrb[0].mxu0 %v553
  %v702 = vpop.f32.mrb[0].mxu0
  %v703 = vadd.f32 0.0, %v702
  %v704 = vpop.f32.mrb[0].mxu0
  %705 = vmatprep.mubr.f32.mxu0 0.0
  %706 = vmatmul.mubr.f32.gmra.mrb[0].mxu0 %v556
  %v707 = vpop.f32.mrb[0].mxu0
  %v708 = vadd.f32 0.0, %v707
  %v709 = vpop.f32.mrb[0].mxu0
  %710 = vmatprep.mubr.f32.mxu0 0.0
  %711 = vmatmul.mubr.f32.gmra.mrb[0].mxu0 %v559
  %v712 = vpop.f32.mrb[0].mxu0
  %v713 = vadd.f32 0.0, %v712
  %v714 = vpop.f32.mrb[0].mxu0
  %715 = vmatprep.mubr.f32.mxu0 0.0
  %716 = vmatmul.mubr.f32.gmra.mrb[0].mxu0 %v562
  %v717 = vpop.f32.mrb[0].mxu0
  %v718 = vadd.f32 0.0, %v717
  %v719 = vpop.f32.mrb[0].mxu0
  %720 = vdwg.mxu0
  %721 = vst.msk [vmem:[%s12] sm:$0xff] %vm337, %v643
  %722 = vst.msk [vmem:[%s12 + $0x8] sm:$0xff] %vm337, %v648
  %723 = vst.msk [vmem:[%s12 + $0x10] sm:$0xff] %vm337, %v653
  %724 = vst.msk [vmem:[%s12 + $0x18] sm:$0xff] %vm337, %v658
  %725 = vst.msk [vmem:[%s12 + $0x20] sm:$0xff] %vm337, %v663
  %726 = vst.msk [vmem:[%s12 + $0x28] sm:$0xff] %vm337, %v668
  %727 = vst.msk [vmem:[%s12 + $0x30] sm:$0xff] %vm337, %v673
  %728 = vst.msk [vmem:[%s12 + $0x38] sm:$0xff] %vm337, %v678
  %729 = vst.msk [vmem:[%s12 + $0x40] sm:$0xff] %vm337, %v683
  %730 = vst.msk [vmem:[%s12 + $0x48] sm:$0xff] %vm337, %v688
  %731 = vst.msk [vmem:[%s12 + $0x50] sm:$0xff] %vm337, %v693
  %732 = vst.msk [vmem:[%s12 + $0x58] sm:$0xff] %vm337, %v698
  %733 = vst.msk [vmem:[%s12 + $0x60] sm:$0xff] %vm337, %v703
  %734 = vst.msk [vmem:[%s12 + $0x68] sm:$0xff] %vm337, %v708
  %735 = vst.msk [vmem:[%s12 + $0x70] sm:$0xff] %vm337, %v713
  %736 = vst.msk [vmem:[%s12 + $0x78] sm:$0xff] %vm337, %v718
  %v738 = vsel %vm337, %v429, 0
  %v741 = vsel %vm337, %v449, 0
  %v744 = vsel %vm337, %v643, 0
  %v747 = vsel %vm337, %v648, 0
  %v750 = vsel %vm337, %v653, 0
  %v753 = vsel %vm337, %v658, 0
  %755 = vmatprep.subr.mxu0 0.0
  %756 = vmatpush1.xpose.msra.mxu0 %v744
  %757 = vmatprep.subr.mxu0 0.0
  %758 = vmatpush1.xpose.msra.mxu0 %v747
  %759 = vmatprep.subr.mxu0 0.0
  %760 = vmatpush1.xpose.msra.mxu0 %v750
  %761 = vmatprep.subr.mxu0 0.0
  %762 = vmatpush1.xpose.msra.mxu0 %v753
  %763 = vmatprep.subr.mxu0 0.0
  %764 = vmatpush1.xpose.msra.mxu0 0.0
  %765 = vmatprep.subr.mxu0 0.0
  %766 = vmatpush1.xpose.msra.mxu0 0.0
  %767 = vmatprep.subr.mxu0 0.0
  %768 = vmatpush1.xpose.msra.mxu0 0.0
  %769 = vmatprep.subr.mxu0 0.0
  %770 = vmatpush1.xpose.msra.mxu0 0.0
  %771 = vmatprep.subr.mxu0 0.0
  %772 = vmatpush1.xpose.msra.mxu0 0.0
  %773 = vmatprep.subr.mxu0 0.0
  %774 = vmatpush1.xpose.msra.mxu0 0.0
  %775 = vmatprep.subr.mxu0 0.0
  %776 = vmatpush1.xpose.msra.mxu0 0.0
  %777 = vmatprep.subr.mxu0 0.0
  %778 = vmatpush1.xpose.msra.mxu0 0.0
  %779 = vmatprep.subr.mxu0 0.0
  %780 = vmatpush1.xpose.msra.mxu0 0.0
  %781 = vmatprep.subr.mxu0 0.0
  %782 = vmatpush1.xpose.msra.mxu0 0.0
  %783 = vmatprep.subr.mxu0 0.0
  %784 = vmatpush1.xpose.msra.mxu0 0.0
  %785 = vmatprep.subr.mxu0 0.0
  %786 = vmatpush1.xpose.msra.mxu0 0.0
  %787 = vmatprep.subr.mxu0 0.0
  %788 = vmatpush1.xpose.msra.mxu0 0.0
  %789 = vmatprep.subr.mxu0 0.0
  %790 = vmatpush1.xpose.msra.mxu0 0.0
  %791 = vmatprep.subr.mxu0 0.0
  %792 = vmatpush1.xpose.msra.mxu0 0.0
  %793 = vmatprep.subr.mxu0 0.0
  %794 = vmatpush1.xpose.msra.mxu0 0.0
  %795 = vmatprep.subr.mxu0 0.0
  %796 = vmatpush1.xpose.msra.mxu0 0.0
  %797 = vmatprep.subr.mxu0 0.0
  %798 = vmatpush1.xpose.msra.mxu0 0.0
  %799 = vmatprep.subr.mxu0 0.0
  %800 = vmatpush1.xpose.msra.mxu0 0.0
  %801 = vmatprep.subr.mxu0 0.0
  %802 = vmatpush1.xpose.msra.mxu0 0.0
  %803 = vmatprep.subr.mxu0 0.0
  %804 = vmatpush1.xpose.msra.mxu0 0.0
  %805 = vmatprep.subr.mxu0 0.0
  %806 = vmatpush1.xpose.msra.mxu0 0.0
  %807 = vmatprep.subr.mxu0 0.0
  %808 = vmatpush1.xpose.msra.mxu0 0.0
  %809 = vmatprep.subr.mxu0 0.0
  %810 = vmatpush1.xpose.msra.mxu0 0.0
  %811 = vmatprep.subr.mxu0 0.0
  %812 = vmatpush1.xpose.msra.mxu0 0.0
  %813 = vmatprep.subr.mxu0 0.0
  %814 = vmatpush1.xpose.msra.mxu0 0.0
  %815 = vmatprep.subr.mxu0 0.0
  %816 = vmatpush1.xpose.msra.mxu0 0.0
  %817 = vmatprep.subr.mxu0 0.0
  %818 = vmatpush1.xpose.msra.mxu0 0.0
  %819 = vmatprep.mubr.f32.mxu0 0.0
  %820 = vmatmul.mubr.f32.gmra.mrb[0].mxu0 %v738
  %v821 = vpop.f32.mrb[0].mxu0
  %v822 = vadd.f32 0.0, %v821
  %v823 = vpop.f32.mrb[0].mxu0
  %824 = vmatprep.mubr.f32.mxu0 0.0
  %825 = vmatmul.mubr.f32.gmra.mrb[0].mxu0 %v741
  %v826 = vpop.f32.mrb[0].mxu0
  %v827 = vadd.f32 0.0, %v826
  %v828 = vpop.f32.mrb[0].mxu0
  %829 = vdwg.mxu0
  %v831 = vsel %vm337, %v434, 0
  %v834 = vsel %vm337, %v454, 0
  %v837 = vsel %vm337, %v663, 0
  %v840 = vsel %vm337, %v668, 0
  %v843 = vsel %vm337, %v673, 0
  %v846 = vsel %vm337, %v678, 0
  %848 = vmatprep.subr.mxu0 0.0
  %849 = vmatpush1.xpose.msra.mxu0 %v837
  %850 = vmatprep.subr.mxu0 0.0
  %851 = vmatpush1.xpose.msra.mxu0 %v840
  %852 = vmatprep.subr.mxu0 0.0
  %853 = vmatpush1.xpose.msra.mxu0 %v843
  %854 = vmatprep.subr.mxu0 0.0
  %855 = vmatpush1.xpose.msra.mxu0 %v846
  %856 = vmatprep.subr.mxu0 0.0
  %857 = vmatpush1.xpose.msra.mxu0 0.0
  %858 = vmatprep.subr.mxu0 0.0
  %859 = vmatpush1.xpose.msra.mxu0 0.0
  %860 = vmatprep.subr.mxu0 0.0
  %861 = vmatpush1.xpose.msra.mxu0 0.0
  %862 = vmatprep.subr.mxu0 0.0
  %863 = vmatpush1.xpose.msra.mxu0 0.0
  %864 = vmatprep.subr.mxu0 0.0
  %865 = vmatpush1.xpose.msra.mxu0 0.0
  %866 = vmatprep.subr.mxu0 0.0
  %867 = vmatpush1.xpose.msra.mxu0 0.0
  %868 = vmatprep.subr.mxu0 0.0
  %869 = vmatpush1.xpose.msra.mxu0 0.0
  %870 = vmatprep.subr.mxu0 0.0
  %871 = vmatpush1.xpose.msra.mxu0 0.0
  %872 = vmatprep.subr.mxu0 0.0
  %873 = vmatpush1.xpose.msra.mxu0 0.0
  %874 = vmatprep.subr.mxu0 0.0
  %875 = vmatpush1.xpose.msra.mxu0 0.0
  %876 = vmatprep.subr.mxu0 0.0
  %877 = vmatpush1.xpose.msra.mxu0 0.0
  %878 = vmatprep.subr.mxu0 0.0
  %879 = vmatpush1.xpose.msra.mxu0 0.0
  %880 = vmatprep.subr.mxu0 0.0
  %881 = vmatpush1.xpose.msra.mxu0 0.0
  %882 = vmatprep.subr.mxu0 0.0
  %883 = vmatpush1.xpose.msra.mxu0 0.0
  %884 = vmatprep.subr.mxu0 0.0
  %885 = vmatpush1.xpose.msra.mxu0 0.0
  %886 = vmatprep.subr.mxu0 0.0
  %887 = vmatpush1.xpose.msra.mxu0 0.0
  %888 = vmatprep.subr.mxu0 0.0
  %889 = vmatpush1.xpose.msra.mxu0 0.0
  %890 = vmatprep.subr.mxu0 0.0
  %891 = vmatpush1.xpose.msra.mxu0 0.0
  %892 = vmatprep.subr.mxu0 0.0
  %893 = vmatpush1.xpose.msra.mxu0 0.0
  %894 = vmatprep.subr.mxu0 0.0
  %895 = vmatpush1.xpose.msra.mxu0 0.0
  %896 = vmatprep.subr.mxu0 0.0
  %897 = vmatpush1.xpose.msra.mxu0 0.0
  %898 = vmatprep.subr.mxu0 0.0
  %899 = vmatpush1.xpose.msra.mxu0 0.0
  %900 = vmatprep.subr.mxu0 0.0
  %901 = vmatpush1.xpose.msra.mxu0 0.0
  %902 = vmatprep.subr.mxu0 0.0
  %903 = vmatpush1.xpose.msra.mxu0 0.0
  %904 = vmatprep.subr.mxu0 0.0
  %905 = vmatpush1.xpose.msra.mxu0 0.0
  %906 = vmatprep.subr.mxu0 0.0
  %907 = vmatpush1.xpose.msra.mxu0 0.0
  %908 = vmatprep.subr.mxu0 0.0
  %909 = vmatpush1.xpose.msra.mxu0 0.0
  %910 = vmatprep.subr.mxu0 0.0
  %911 = vmatpush1.xpose.msra.mxu0 0.0
  %912 = vmatprep.mubr.f32.mxu0 0.0
  %913 = vmatmul.mubr.f32.gmra.mrb[0].mxu0 %v831
  %v914 = vpop.f32.mrb[0].mxu0
  %v915 = vadd.f32 0.0, %v914
  %v916 = vpop.f32.mrb[0].mxu0
  %917 = vmatprep.mubr.f32.mxu0 0.0
  %918 = vmatmul.mubr.f32.gmra.mrb[0].mxu0 %v834
  %v919 = vpop.f32.mrb[0].mxu0
  %v920 = vadd.f32 0.0, %v919
  %v921 = vpop.f32.mrb[0].mxu0
  %922 = vdwg.mxu0
  %v924 = vsel %vm337, %v439, 0
  %v927 = vsel %vm337, %v459, 0
  %v930 = vsel %vm337, %v683, 0
  %v933 = vsel %vm337, %v688, 0
  %v936 = vsel %vm337, %v693, 0
  %v939 = vsel %vm337, %v698, 0
  %941 = vmatprep.subr.mxu0 0.0
  %942 = vmatpush1.xpose.msra.mxu0 %v930
  %943 = vmatprep.subr.mxu0 0.0
  %944 = vmatpush1.xpose.msra.mxu0 %v933
  %945 = vmatprep.subr.mxu0 0.0
  %946 = vmatpush1.xpose.msra.mxu0 %v936
  %947 = vmatprep.subr.mxu0 0.0
  %948 = vmatpush1.xpose.msra.mxu0 %v939
  %949 = vmatprep.subr.mxu0 0.0
  %950 = vmatpush1.xpose.msra.mxu0 0.0
  %951 = vmatprep.subr.mxu0 0.0
  %952 = vmatpush1.xpose.msra.mxu0 0.0
  %953 = vmatprep.subr.mxu0 0.0
  %954 = vmatpush1.xpose.msra.mxu0 0.0
  %955 = vmatprep.subr.mxu0 0.0
  %956 = vmatpush1.xpose.msra.mxu0 0.0
  %957 = vmatprep.subr.mxu0 0.0
  %958 = vmatpush1.xpose.msra.mxu0 0.0
  %959 = vmatprep.subr.mxu0 0.0
  %960 = vmatpush1.xpose.msra.mxu0 0.0
  %961 = vmatprep.subr.mxu0 0.0
  %962 = vmatpush1.xpose.msra.mxu0 0.0
  %963 = vmatprep.subr.mxu0 0.0
  %964 = vmatpush1.xpose.msra.mxu0 0.0
  %965 = vmatprep.subr.mxu0 0.0
  %966 = vmatpush1.xpose.msra.mxu0 0.0
  %967 = vmatprep.subr.mxu0 0.0
  %968 = vmatpush1.xpose.msra.mxu0 0.0
  %969 = vmatprep.subr.mxu0 0.0
  %970 = vmatpush1.xpose.msra.mxu0 0.0
  %971 = vmatprep.subr.mxu0 0.0
  %972 = vmatpush1.xpose.msra.mxu0 0.0
  %973 = vmatprep.subr.mxu0 0.0
  %974 = vmatpush1.xpose.msra.mxu0 0.0
  %975 = vmatprep.subr.mxu0 0.0
  %976 = vmatpush1.xpose.msra.mxu0 0.0
  %977 = vmatprep.subr.mxu0 0.0
  %978 = vmatpush1.xpose.msra.mxu0 0.0
  %979 = vmatprep.subr.mxu0 0.0
  %980 = vmatpush1.xpose.msra.mxu0 0.0
  %981 = vmatprep.subr.mxu0 0.0
  %982 = vmatpush1.xpose.msra.mxu0 0.0
  %983 = vmatprep.subr.mxu0 0.0
  %984 = vmatpush1.xpose.msra.mxu0 0.0
  %985 = vmatprep.subr.mxu0 0.0
  %986 = vmatpush1.xpose.msra.mxu0 0.0
  %987 = vmatprep.subr.mxu0 0.0
  %988 = vmatpush1.xpose.msra.mxu0 0.0
  %989 = vmatprep.subr.mxu0 0.0
  %990 = vmatpush1.xpose.msra.mxu0 0.0
  %991 = vmatprep.subr.mxu0 0.0
  %992 = vmatpush1.xpose.msra.mxu0 0.0
  %993 = vmatprep.subr.mxu0 0.0
  %994 = vmatpush1.xpose.msra.mxu0 0.0
  %995 = vmatprep.subr.mxu0 0.0
  %996 = vmatpush1.xpose.msra.mxu0 0.0
  %997 = vmatprep.subr.mxu0 0.0
  %998 = vmatpush1.xpose.msra.mxu0 0.0
  %999 = vmatprep.subr.mxu0 0.0
  %1000 = vmatpush1.xpose.msra.mxu0 0.0
  %1001 = vmatprep.subr.mxu0 0.0
  %1002 = vmatpush1.xpose.msra.mxu0 0.0
  %1003 = vmatprep.subr.mxu0 0.0
  %1004 = vmatpush1.xpose.msra.mxu0 0.0
  %1005 = vmatprep.mubr.f32.mxu0 0.0
  %1006 = vmatmul.mubr.f32.gmra.mrb[0].mxu0 %v924
  %v1007 = vpop.f32.mrb[0].mxu0
  %v1008 = vadd.f32 0.0, %v1007
  %v1009 = vpop.f32.mrb[0].mxu0
  %1010 = vmatprep.mubr.f32.mxu0 0.0
  %1011 = vmatmul.mubr.f32.gmra.mrb[0].mxu0 %v927
  %v1012 = vpop.f32.mrb[0].mxu0
  %v1013 = vadd.f32 0.0, %v1012
  %v1014 = vpop.f32.mrb[0].mxu0
  %1015 = vdwg.mxu0
  %v1017 = vsel %vm337, %v444, 0
  %v1020 = vsel %vm337, %v464, 0
  %v1023 = vsel %vm337, %v703, 0
  %v1026 = vsel %vm337, %v708, 0
  %v1029 = vsel %vm337, %v713, 0
  %v1032 = vsel %vm337, %v718, 0
  %1034 = vmatprep.subr.mxu0 0.0
  %1035 = vmatpush1.xpose.msra.mxu0 %v1023
  %1036 = vmatprep.subr.mxu0 0.0
  %1037 = vmatpush1.xpose.msra.mxu0 %v1026
  %1038 = vmatprep.subr.mxu0 0.0
  %1039 = vmatpush1.xpose.msra.mxu0 %v1029
  %1040 = vmatprep.subr.mxu0 0.0
  %1041 = vmatpush1.xpose.msra.mxu0 %v1032
  %1042 = vmatprep.subr.mxu0 0.0
  %1043 = vmatpush1.xpose.msra.mxu0 0.0
  %1044 = vmatprep.subr.mxu0 0.0
  %1045 = vmatpush1.xpose.msra.mxu0 0.0
  %1046 = vmatprep.subr.mxu0 0.0
  %1047 = vmatpush1.xpose.msra.mxu0 0.0
  %1048 = vmatprep.subr.mxu0 0.0
  %1049 = vmatpush1.xpose.msra.mxu0 0.0
  %1050 = vmatprep.subr.mxu0 0.0
  %1051 = vmatpush1.xpose.msra.mxu0 0.0
  %1052 = vmatprep.subr.mxu0 0.0
  %1053 = vmatpush1.xpose.msra.mxu0 0.0
  %1054 = vmatprep.subr.mxu0 0.0
  %1055 = vmatpush1.xpose.msra.mxu0 0.0
  %1056 = vmatprep.subr.mxu0 0.0
  %1057 = vmatpush1.xpose.msra.mxu0 0.0
  %1058 = vmatprep.subr.mxu0 0.0
  %1059 = vmatpush1.xpose.msra.mxu0 0.0
  %1060 = vmatprep.subr.mxu0 0.0
  %1061 = vmatpush1.xpose.msra.mxu0 0.0
  %1062 = vmatprep.subr.mxu0 0.0
  %1063 = vmatpush1.xpose.msra.mxu0 0.0
  %1064 = vmatprep.subr.mxu0 0.0
  %1065 = vmatpush1.xpose.msra.mxu0 0.0
  %1066 = vmatprep.subr.mxu0 0.0
  %1067 = vmatpush1.xpose.msra.mxu0 0.0
  %1068 = vmatprep.subr.mxu0 0.0
  %1069 = vmatpush1.xpose.msra.mxu0 0.0
  %1070 = vmatprep.subr.mxu0 0.0
  %1071 = vmatpush1.xpose.msra.mxu0 0.0
  %1072 = vmatprep.subr.mxu0 0.0
  %1073 = vmatpush1.xpose.msra.mxu0 0.0
  %1074 = vmatprep.subr.mxu0 0.0
  %1075 = vmatpush1.xpose.msra.mxu0 0.0
  %1076 = vmatprep.subr.mxu0 0.0
  %1077 = vmatpush1.xpose.msra.mxu0 0.0
  %1078 = vmatprep.subr.mxu0 0.0
  %1079 = vmatpush1.xpose.msra.mxu0 0.0
  %1080 = vmatprep.subr.mxu0 0.0
  %1081 = vmatpush1.xpose.msra.mxu0 0.0
  %1082 = vmatprep.subr.mxu0 0.0
  %1083 = vmatpush1.xpose.msra.mxu0 0.0
  %1084 = vmatprep.subr.mxu0 0.0
  %1085 = vmatpush1.xpose.msra.mxu0 0.0
  %1086 = vmatprep.subr.mxu0 0.0
  %1087 = vmatpush1.xpose.msra.mxu0 0.0
  %1088 = vmatprep.subr.mxu0 0.0
  %1089 = vmatpush1.xpose.msra.mxu0 0.0
  %1090 = vmatprep.subr.mxu0 0.0
  %1091 = vmatpush1.xpose.msra.mxu0 0.0
  %1092 = vmatprep.subr.mxu0 0.0
  %1093 = vmatpush1.xpose.msra.mxu0 0.0
  %1094 = vmatprep.subr.mxu0 0.0
  %1095 = vmatpush1.xpose.msra.mxu0 0.0
  %1096 = vmatprep.subr.mxu0 0.0
  %1097 = vmatpush1.xpose.msra.mxu0 0.0
  %1098 = vmatprep.mubr.f32.mxu0 0.0
  %1099 = vmatmul.mubr.f32.gmra.mrb[0].mxu0 %v1017
  %v1100 = vpop.f32.mrb[0].mxu0
  %v1101 = vadd.f32 0.0, %v1100
  %v1102 = vpop.f32.mrb[0].mxu0
  %1103 = vmatprep.mubr.f32.mxu0 0.0
  %1104 = vmatmul.mubr.f32.gmra.mrb[0].mxu0 %v1020
  %v1105 = vpop.f32.mrb[0].mxu0
  %v1106 = vadd.f32 0.0, %v1105
  %v1107 = vpop.f32.mrb[0].mxu0
  %1108 = vdwg.mxu0
  %1109 = vst.msk [vmem:[%s11] sm:$0xff] %vm337, %v822
  %1110 = vst.msk [vmem:[%s11 + $0x8] sm:$0xff] %vm337, %v915
  %1111 = vst.msk [vmem:[%s11 + $0x10] sm:$0xff] %vm337, %v1008
  %1112 = vst.msk [vmem:[%s11 + $0x18] sm:$0xff] %vm337, %v1101
  %1113 = vst.msk [vmem:[%s11 + $0x20] sm:$0xff] %vm337, %v827
  %1114 = vst.msk [vmem:[%s11 + $0x28] sm:$0xff] %vm337, %v920
  %1115 = vst.msk [vmem:[%s11 + $0x30] sm:$0xff] %vm337, %v1013
  %1116 = vst.msk [vmem:[%s11 + $0x38] sm:$0xff] %vm337, %v1106
  %v1117 = vld [vmem:[%s4] sm:$0xff]
  %v1118 = vld [vmem:[%s4 + $0x8] sm:$0xff]
  %v1119 = vld [vmem:[%s4 + $0x10] sm:$0xff]
  %v1120 = vld [vmem:[%s4 + $0x18] sm:$0xff]
  %v1122 = vsel %vm337, %v822, 0
  %v1125 = vsel %vm337, %v915, 0
  %v1128 = vsel %vm337, %v1008, 0
  %v1131 = vsel %vm337, %v1101, 0
  %v1134 = vsel %vm337, %v827, 0
  %v1137 = vsel %vm337, %v920, 0
  %v1140 = vsel %vm337, %v1013, 0
  %v1143 = vsel %vm337, %v1106, 0
  %1145 = vmatprep.subr.mxu0 0.0
  %1146 = vmatpush1.msra.mxu0 %v1117
  %1147 = vmatprep.subr.mxu0 0.0
  %1148 = vmatpush1.msra.mxu0 %v1118
  %1149 = vmatprep.subr.mxu0 0.0
  %1150 = vmatpush1.msra.mxu0 %v1119
  %1151 = vmatprep.subr.mxu0 0.0
  %1152 = vmatpush1.msra.mxu0 %v1120
  %1153 = vmatprep.subr.mxu0 0.0
  %1154 = vmatpush1.msra.mxu0 0.0
  %1155 = vmatprep.subr.mxu0 0.0
  %1156 = vmatpush1.msra.mxu0 0.0
  %1157 = vmatprep.subr.mxu0 0.0
  %1158 = vmatpush1.msra.mxu0 0.0
  %1159 = vmatprep.subr.mxu0 0.0
  %1160 = vmatpush1.msra.mxu0 0.0
  %1161 = vmatprep.subr.mxu0 0.0
  %1162 = vmatpush1.msra.mxu0 0.0
  %1163 = vmatprep.subr.mxu0 0.0
  %1164 = vmatpush1.msra.mxu0 0.0
  %1165 = vmatprep.subr.mxu0 0.0
  %1166 = vmatpush1.msra.mxu0 0.0
  %1167 = vmatprep.subr.mxu0 0.0
  %1168 = vmatpush1.msra.mxu0 0.0
  %1169 = vmatprep.subr.mxu0 0.0
  %1170 = vmatpush1.msra.mxu0 0.0
  %1171 = vmatprep.subr.mxu0 0.0
  %1172 = vmatpush1.msra.mxu0 0.0
  %1173 = vmatprep.subr.mxu0 0.0
  %1174 = vmatpush1.msra.mxu0 0.0
  %1175 = vmatprep.subr.mxu0 0.0
  %1176 = vmatpush1.msra.mxu0 0.0
  %1177 = vmatprep.subr.mxu0 0.0
  %1178 = vmatpush1.msra.mxu0 0.0
  %1179 = vmatprep.subr.mxu0 0.0
  %1180 = vmatpush1.msra.mxu0 0.0
  %1181 = vmatprep.subr.mxu0 0.0
  %1182 = vmatpush1.msra.mxu0 0.0
  %1183 = vmatprep.subr.mxu0 0.0
  %1184 = vmatpush1.msra.mxu0 0.0
  %1185 = vmatprep.subr.mxu0 0.0
  %1186 = vmatpush1.msra.mxu0 0.0
  %1187 = vmatprep.subr.mxu0 0.0
  %1188 = vmatpush1.msra.mxu0 0.0
  %1189 = vmatprep.subr.mxu0 0.0
  %1190 = vmatpush1.msra.mxu0 0.0
  %1191 = vmatprep.subr.mxu0 0.0
  %1192 = vmatpush1.msra.mxu0 0.0
  %1193 = vmatprep.subr.mxu0 0.0
  %1194 = vmatpush1.msra.mxu0 0.0
  %1195 = vmatprep.subr.mxu0 0.0
  %1196 = vmatpush1.msra.mxu0 0.0
  %1197 = vmatprep.subr.mxu0 0.0
  %1198 = vmatpush1.msra.mxu0 0.0
  %1199 = vmatprep.subr.mxu0 0.0
  %1200 = vmatpush1.msra.mxu0 0.0
  %1201 = vmatprep.subr.mxu0 0.0
  %1202 = vmatpush1.msra.mxu0 0.0
  %1203 = vmatprep.subr.mxu0 0.0
  %1204 = vmatpush1.msra.mxu0 0.0
  %1205 = vmatprep.subr.mxu0 0.0
  %1206 = vmatpush1.msra.mxu0 0.0
  %1207 = vmatprep.subr.mxu0 0.0
  %1208 = vmatpush1.msra.mxu0 0.0
  %1209 = vmatprep.mubr.f32.mxu0 0.0
  %1210 = vmatmul.mubr.f32.gmra.mrb[0].mxu0 %v1122
  %v1211 = vpop.f32.mrb[0].mxu0
  %v1212 = vadd.f32 0.0, %v1211
  %v1213 = vpop.f32.mrb[0].mxu0
  %1214 = vmatprep.mubr.f32.mxu0 0.0
  %1215 = vmatmul.mubr.f32.gmra.mrb[0].mxu0 %v1125
  %v1216 = vpop.f32.mrb[0].mxu0
  %v1217 = vadd.f32 0.0, %v1216
  %v1218 = vpop.f32.mrb[0].mxu0
  %1219 = vmatprep.mubr.f32.mxu0 0.0
  %1220 = vmatmul.mubr.f32.gmra.mrb[0].mxu0 %v1128
  %v1221 = vpop.f32.mrb[0].mxu0
  %v1222 = vadd.f32 0.0, %v1221
  %v1223 = vpop.f32.mrb[0].mxu0
  %1224 = vmatprep.mubr.f32.mxu0 0.0
  %1225 = vmatmul.mubr.f32.gmra.mrb[0].mxu0 %v1131
  %v1226 = vpop.f32.mrb[0].mxu0
  %v1227 = vadd.f32 0.0, %v1226
  %v1228 = vpop.f32.mrb[0].mxu0
  %1229 = vmatprep.mubr.f32.mxu0 0.0
  %1230 = vmatmul.mubr.f32.gmra.mrb[0].mxu0 %v1134
  %v1231 = vpop.f32.mrb[0].mxu0
  %v1232 = vadd.f32 0.0, %v1231
  %v1233 = vpop.f32.mrb[0].mxu0
  %1234 = vmatprep.mubr.f32.mxu0 0.0
  %1235 = vmatmul.mubr.f32.gmra.mrb[0].mxu0 %v1137
  %v1236 = vpop.f32.mrb[0].mxu0
  %v1237 = vadd.f32 0.0, %v1236
  %v1238 = vpop.f32.mrb[0].mxu0
  %1239 = vmatprep.mubr.f32.mxu0 0.0
  %1240 = vmatmul.mubr.f32.gmra.mrb[0].mxu0 %v1140
  %v1241 = vpop.f32.mrb[0].mxu0
  %v1242 = vadd.f32 0.0, %v1241
  %v1243 = vpop.f32.mrb[0].mxu0
  %1244 = vmatprep.mubr.f32.mxu0 0.0
  %1245 = vmatmul.mubr.f32.gmra.mrb[0].mxu0 %v1143
  %v1246 = vpop.f32.mrb[0].mxu0
  %v1247 = vadd.f32 0.0, %v1246
  %v1248 = vpop.f32.mrb[0].mxu0
  %1249 = vmatprep.mubr.f32.mxu0 0.0
  %1250 = vmatmul.mubr.f32.gmra.mrb[0].mxu0 %v738
  %v1251 = vpop.f32.mrb[0].mxu0
  %v1252 = vadd.f32 0.0, %v1251
  %v1253 = vpop.f32.mrb[0].mxu0
  %1254 = vmatprep.mubr.f32.mxu0 0.0
  %1255 = vmatmul.mubr.f32.gmra.mrb[0].mxu0 %v831
  %v1256 = vpop.f32.mrb[0].mxu0
  %v1257 = vadd.f32 0.0, %v1256
  %v1258 = vpop.f32.mrb[0].mxu0
  %1259 = vmatprep.mubr.f32.mxu0 0.0
  %1260 = vmatmul.mubr.f32.gmra.mrb[0].mxu0 %v924
  %v1261 = vpop.f32.mrb[0].mxu0
  %v1262 = vadd.f32 0.0, %v1261
  %v1263 = vpop.f32.mrb[0].mxu0
  %1264 = vmatprep.mubr.f32.mxu0 0.0
  %1265 = vmatmul.mubr.f32.gmra.mrb[0].mxu0 %v1017
  %v1266 = vpop.f32.mrb[0].mxu0
  %v1267 = vadd.f32 0.0, %v1266
  %v1268 = vpop.f32.mrb[0].mxu0
  %1269 = vmatprep.mubr.f32.mxu0 0.0
  %1270 = vmatmul.mubr.f32.gmra.mrb[0].mxu0 %v741
  %v1271 = vpop.f32.mrb[0].mxu0
  %v1272 = vadd.f32 0.0, %v1271
  %v1273 = vpop.f32.mrb[0].mxu0
  %1274 = vmatprep.mubr.f32.mxu0 0.0
  %1275 = vmatmul.mubr.f32.gmra.mrb[0].mxu0 %v834
  %v1276 = vpop.f32.mrb[0].mxu0
  %v1277 = vadd.f32 0.0, %v1276
  %v1278 = vpop.f32.mrb[0].mxu0
  %1279 = vmatprep.mubr.f32.mxu0 0.0
  %1280 = vmatmul.mubr.f32.gmra.mrb[0].mxu0 %v927
  %v1281 = vpop.f32.mrb[0].mxu0
  %v1282 = vadd.f32 0.0, %v1281
  %v1283 = vpop.f32.mrb[0].mxu0
  %1284 = vmatprep.mubr.f32.mxu0 0.0
  %1285 = vmatmul.mubr.f32.gmra.mrb[0].mxu0 %v1020
  %v1286 = vpop.f32.mrb[0].mxu0
  %v1287 = vadd.f32 0.0, %v1286
  %v1288 = vpop.f32.mrb[0].mxu0
  %1289 = vdwg.mxu0
  %v1290 = vmax.f32 %v1212, 0.0
  %v1291 = vmax.f32 %v1217, 0.0
  %v1292 = vmax.f32 %v1222, 0.0
  %v1293 = vmax.f32 %v1227, 0.0
  %v1294 = vmax.f32 %v1232, 0.0
  %v1295 = vmax.f32 %v1237, 0.0
  %v1296 = vmax.f32 %v1242, 0.0
  %v1297 = vmax.f32 %v1247, 0.0
  %v1298 = vmax.f32 %v1252, 0.0
  %v1299 = vmax.f32 %v1257, 0.0
  %v1300 = vmax.f32 %v1262, 0.0
  %v1301 = vmax.f32 %v1267, 0.0
  %v1302 = vmax.f32 %v1272, 0.0
  %v1303 = vmax.f32 %v1277, 0.0
  %v1304 = vmax.f32 %v1282, 0.0
  %v1305 = vmax.f32 %v1287, 0.0
  %v1306 = vld [vmem:[%s5] sm:$0xff]
  %v1307 = vld [vmem:[%s5 + $0x8] sm:$0xff]
  %v1309 = vsel %vm49, %v1290, 0
  %v1312 = vsel %vm49, %v1291, 0
  %v1315 = vsel %vm49, %v1292, 0
  %v1318 = vsel %vm49, %v1293, 0
  %v1321 = vsel %vm49, %v1294, 0
  %v1324 = vsel %vm49, %v1295, 0
  %v1327 = vsel %vm49, %v1296, 0
  %v1330 = vsel %vm49, %v1297, 0
  %v1333 = vsel %vm49, %v1298, 0
  %v1336 = vsel %vm49, %v1299, 0
  %v1339 = vsel %vm49, %v1300, 0
  %v1342 = vsel %vm49, %v1301, 0
  %v1345 = vsel %vm49, %v1302, 0
  %v1348 = vsel %vm49, %v1303, 0
  %v1351 = vsel %vm49, %v1304, 0
  %v1354 = vsel %vm49, %v1305, 0
  %1356 = vmatprep.subr.mxu0 0.0
  %1357 = vmatpush1.msra.mxu0 %v1306
  %1358 = vmatprep.subr.mxu0 0.0
  %1359 = vmatpush1.msra.mxu0 %v1307
  %1360 = vmatprep.subr.mxu0 0.0
  %1361 = vmatpush1.msra.mxu0 0.0
  %1362 = vmatprep.subr.mxu0 0.0
  %1363 = vmatpush1.msra.mxu0 0.0
  %1364 = vmatprep.subr.mxu0 0.0
  %1365 = vmatpush1.msra.mxu0 0.0
  %1366 = vmatprep.subr.mxu0 0.0
  %1367 = vmatpush1.msra.mxu0 0.0
  %1368 = vmatprep.subr.mxu0 0.0
  %1369 = vmatpush1.msra.mxu0 0.0
  %1370 = vmatprep.subr.mxu0 0.0
  %1371 = vmatpush1.msra.mxu0 0.0
  %1372 = vmatprep.subr.mxu0 0.0
  %1373 = vmatpush1.msra.mxu0 0.0
  %1374 = vmatprep.subr.mxu0 0.0
  %1375 = vmatpush1.msra.mxu0 0.0
  %1376 = vmatprep.subr.mxu0 0.0
  %1377 = vmatpush1.msra.mxu0 0.0
  %1378 = vmatprep.subr.mxu0 0.0
  %1379 = vmatpush1.msra.mxu0 0.0
  %1380 = vmatprep.subr.mxu0 0.0
  %1381 = vmatpush1.msra.mxu0 0.0
  %1382 = vmatprep.subr.mxu0 0.0
  %1383 = vmatpush1.msra.mxu0 0.0
  %1384 = vmatprep.subr.mxu0 0.0
  %1385 = vmatpush1.msra.mxu0 0.0
  %1386 = vmatprep.subr.mxu0 0.0
  %1387 = vmatpush1.msra.mxu0 0.0
  %1388 = vmatprep.subr.mxu0 0.0
  %1389 = vmatpush1.msra.mxu0 0.0
  %1390 = vmatprep.subr.mxu0 0.0
  %1391 = vmatpush1.msra.mxu0 0.0
  %1392 = vmatprep.subr.mxu0 0.0
  %1393 = vmatpush1.msra.mxu0 0.0
  %1394 = vmatprep.subr.mxu0 0.0
  %1395 = vmatpush1.msra.mxu0 0.0
  %1396 = vmatprep.subr.mxu0 0.0
  %1397 = vmatpush1.msra.mxu0 0.0
  %1398 = vmatprep.subr.mxu0 0.0
  %1399 = vmatpush1.msra.mxu0 0.0
  %1400 = vmatprep.subr.mxu0 0.0
  %1401 = vmatpush1.msra.mxu0 0.0
  %1402 = vmatprep.subr.mxu0 0.0
  %1403 = vmatpush1.msra.mxu0 0.0
  %1404 = vmatprep.subr.mxu0 0.0
  %1405 = vmatpush1.msra.mxu0 0.0
  %1406 = vmatprep.subr.mxu0 0.0
  %1407 = vmatpush1.msra.mxu0 0.0
  %1408 = vmatprep.subr.mxu0 0.0
  %1409 = vmatpush1.msra.mxu0 0.0
  %1410 = vmatprep.subr.mxu0 0.0
  %1411 = vmatpush1.msra.mxu0 0.0
  %1412 = vmatprep.subr.mxu0 0.0
  %1413 = vmatpush1.msra.mxu0 0.0
  %1414 = vmatprep.subr.mxu0 0.0
  %1415 = vmatpush1.msra.mxu0 0.0
  %1416 = vmatprep.subr.mxu0 0.0
  %1417 = vmatpush1.msra.mxu0 0.0
  %1418 = vmatprep.subr.mxu0 0.0
  %1419 = vmatpush1.msra.mxu0 0.0
  %1420 = vmatprep.mubr.f32.mxu0 0.0
  %1421 = vmatmul.mubr.f32.gmra.mrb[0].mxu0 %v1309
  %v1422 = vpop.f32.mrb[0].mxu0
  %v1423 = vadd.f32 0.0, %v1422
  %v1424 = vpop.f32.mrb[0].mxu0
  %1425 = vmatprep.mubr.f32.mxu0 0.0
  %1426 = vmatmul.mubr.f32.gmra.mrb[0].mxu0 %v1312
  %v1427 = vpop.f32.mrb[0].mxu0
  %v1428 = vadd.f32 0.0, %v1427
  %v1429 = vpop.f32.mrb[0].mxu0
  %1430 = vmatprep.mubr.f32.mxu0 0.0
  %1431 = vmatmul.mubr.f32.gmra.mrb[0].mxu0 %v1315
  %v1432 = vpop.f32.mrb[0].mxu0
  %v1433 = vadd.f32 0.0, %v1432
  %v1434 = vpop.f32.mrb[0].mxu0
  %1435 = vmatprep.mubr.f32.mxu0 0.0
  %1436 = vmatmul.mubr.f32.gmra.mrb[0].mxu0 %v1318
  %v1437 = vpop.f32.mrb[0].mxu0
  %v1438 = vadd.f32 0.0, %v1437
  %v1439 = vpop.f32.mrb[0].mxu0
  %1440 = vmatprep.mubr.f32.mxu0 0.0
  %1441 = vmatmul.mubr.f32.gmra.mrb[0].mxu0 %v1321
  %v1442 = vpop.f32.mrb[0].mxu0
  %v1443 = vadd.f32 0.0, %v1442
  %v1444 = vpop.f32.mrb[0].mxu0
  %1445 = vmatprep.mubr.f32.mxu0 0.0
  %1446 = vmatmul.mubr.f32.gmra.mrb[0].mxu0 %v1324
  %v1447 = vpop.f32.mrb[0].mxu0
  %v1448 = vadd.f32 0.0, %v1447
  %v1449 = vpop.f32.mrb[0].mxu0
  %1450 = vmatprep.mubr.f32.mxu0 0.0
  %1451 = vmatmul.mubr.f32.gmra.mrb[0].mxu0 %v1327
  %v1452 = vpop.f32.mrb[0].mxu0
  %v1453 = vadd.f32 0.0, %v1452
  %v1454 = vpop.f32.mrb[0].mxu0
  %1455 = vmatprep.mubr.f32.mxu0 0.0
  %1456 = vmatmul.mubr.f32.gmra.mrb[0].mxu0 %v1330
  %v1457 = vpop.f32.mrb[0].mxu0
  %v1458 = vadd.f32 0.0, %v1457
  %v1459 = vpop.f32.mrb[0].mxu0
  %1460 = vmatprep.mubr.f32.mxu0 0.0
  %1461 = vmatmul.mubr.f32.gmra.mrb[0].mxu0 %v1333
  %v1462 = vpop.f32.mrb[0].mxu0
  %v1463 = vadd.f32 0.0, %v1462
  %v1464 = vpop.f32.mrb[0].mxu0
  %1465 = vmatprep.mubr.f32.mxu0 0.0
  %1466 = vmatmul.mubr.f32.gmra.mrb[0].mxu0 %v1336
  %v1467 = vpop.f32.mrb[0].mxu0
  %v1468 = vadd.f32 0.0, %v1467
  %v1469 = vpop.f32.mrb[0].mxu0
  %1470 = vmatprep.mubr.f32.mxu0 0.0
  %1471 = vmatmul.mubr.f32.gmra.mrb[0].mxu0 %v1339
  %v1472 = vpop.f32.mrb[0].mxu0
  %v1473 = vadd.f32 0.0, %v1472
  %v1474 = vpop.f32.mrb[0].mxu0
  %1475 = vmatprep.mubr.f32.mxu0 0.0
  %1476 = vmatmul.mubr.f32.gmra.mrb[0].mxu0 %v1342
  %v1477 = vpop.f32.mrb[0].mxu0
  %v1478 = vadd.f32 0.0, %v1477
  %v1479 = vpop.f32.mrb[0].mxu0
  %1480 = vmatprep.mubr.f32.mxu0 0.0
  %1481 = vmatmul.mubr.f32.gmra.mrb[0].mxu0 %v1345
  %v1482 = vpop.f32.mrb[0].mxu0
  %v1483 = vadd.f32 0.0, %v1482
  %v1484 = vpop.f32.mrb[0].mxu0
  %1485 = vmatprep.mubr.f32.mxu0 0.0
  %1486 = vmatmul.mubr.f32.gmra.mrb[0].mxu0 %v1348
  %v1487 = vpop.f32.mrb[0].mxu0
  %v1488 = vadd.f32 0.0, %v1487
  %v1489 = vpop.f32.mrb[0].mxu0
  %1490 = vmatprep.mubr.f32.mxu0 0.0
  %1491 = vmatmul.mubr.f32.gmra.mrb[0].mxu0 %v1351
  %v1492 = vpop.f32.mrb[0].mxu0
  %v1493 = vadd.f32 0.0, %v1492
  %v1494 = vpop.f32.mrb[0].mxu0
  %1495 = vmatprep.mubr.f32.mxu0 0.0
  %1496 = vmatmul.mubr.f32.gmra.mrb[0].mxu0 %v1354
  %v1497 = vpop.f32.mrb[0].mxu0
  %v1498 = vadd.f32 0.0, %v1497
  %v1499 = vpop.f32.mrb[0].mxu0
  %1500 = vdwg.mxu0
  %v1501 = vmax.f32 %v1423, 0.0
  %v1502 = vmax.f32 %v1428, 0.0
  %v1503 = vmax.f32 %v1433, 0.0
  %v1504 = vmax.f32 %v1438, 0.0
  %v1505 = vmax.f32 %v1443, 0.0
  %v1506 = vmax.f32 %v1448, 0.0
  %v1507 = vmax.f32 %v1453, 0.0
  %v1508 = vmax.f32 %v1458, 0.0
  %v1509 = vmax.f32 %v1463, 0.0
  %v1510 = vmax.f32 %v1468, 0.0
  %v1511 = vmax.f32 %v1473, 0.0
  %v1512 = vmax.f32 %v1478, 0.0
  %v1513 = vmax.f32 %v1483, 0.0
  %v1514 = vmax.f32 %v1488, 0.0
  %v1515 = vmax.f32 %v1493, 0.0
  %v1516 = vmax.f32 %v1498, 0.0
  %v1517 = vld [vmem:[%s6] sm:$0xff]
  %v1518 = vld [vmem:[%s6 + $0x8] sm:$0xff]
  %v1519 = vld [vmem:[%s6 + $0x10] sm:$0xff]
  %v1520 = vld [vmem:[%s6 + $0x18] sm:$0xff]
  %v1522 = vsel %vm337, %v1501, 0
  %v1525 = vsel %vm337, %v1502, 0
  %v1528 = vsel %vm337, %v1503, 0
  %v1531 = vsel %vm337, %v1504, 0
  %v1534 = vsel %vm337, %v1505, 0
  %v1537 = vsel %vm337, %v1506, 0
  %v1540 = vsel %vm337, %v1507, 0
  %v1543 = vsel %vm337, %v1508, 0
  %v1546 = vsel %vm337, %v1509, 0
  %v1549 = vsel %vm337, %v1510, 0
  %v1552 = vsel %vm337, %v1511, 0
  %v1555 = vsel %vm337, %v1512, 0
  %v1558 = vsel %vm337, %v1513, 0
  %v1561 = vsel %vm337, %v1514, 0
  %v1564 = vsel %vm337, %v1515, 0
  %v1567 = vsel %vm337, %v1516, 0
  %1569 = vmatprep.subr.mxu0 0.0
  %1570 = vmatpush1.msra.mxu0 %v1517
  %1571 = vmatprep.subr.mxu0 0.0
  %1572 = vmatpush1.msra.mxu0 %v1518
  %1573 = vmatprep.subr.mxu0 0.0
  %1574 = vmatpush1.msra.mxu0 %v1519
  %1575 = vmatprep.subr.mxu0 0.0
  %1576 = vmatpush1.msra.mxu0 %v1520
  %1577 = vmatprep.subr.mxu0 0.0
  %1578 = vmatpush1.msra.mxu0 0.0
  %1579 = vmatprep.subr.mxu0 0.0
  %1580 = vmatpush1.msra.mxu0 0.0
  %1581 = vmatprep.subr.mxu0 0.0
  %1582 = vmatpush1.msra.mxu0 0.0
  %1583 = vmatprep.subr.mxu0 0.0
  %1584 = vmatpush1.msra.mxu0 0.0
  %1585 = vmatprep.subr.mxu0 0.0
  %1586 = vmatpush1.msra.mxu0 0.0
  %1587 = vmatprep.subr.mxu0 0.0
  %1588 = vmatpush1.msra.mxu0 0.0
  %1589 = vmatprep.subr.mxu0 0.0
  %1590 = vmatpush1.msra.mxu0 0.0
  %1591 = vmatprep.subr.mxu0 0.0
  %1592 = vmatpush1.msra.mxu0 0.0
  %1593 = vmatprep.subr.mxu0 0.0
  %1594 = vmatpush1.msra.mxu0 0.0
  %1595 = vmatprep.subr.mxu0 0.0
  %1596 = vmatpush1.msra.mxu0 0.0
  %1597 = vmatprep.subr.mxu0 0.0
  %1598 = vmatpush1.msra.mxu0 0.0
  %1599 = vmatprep.subr.mxu0 0.0
  %1600 = vmatpush1.msra.mxu0 0.0
  %1601 = vmatprep.subr.mxu0 0.0
  %1602 = vmatpush1.msra.mxu0 0.0
  %1603 = vmatprep.subr.mxu0 0.0
  %1604 = vmatpush1.msra.mxu0 0.0
  %1605 = vmatprep.subr.mxu0 0.0
  %1606 = vmatpush1.msra.mxu0 0.0
  %1607 = vmatprep.subr.mxu0 0.0
  %1608 = vmatpush1.msra.mxu0 0.0
  %1609 = vmatprep.subr.mxu0 0.0
  %1610 = vmatpush1.msra.mxu0 0.0
  %1611 = vmatprep.subr.mxu0 0.0
  %1612 = vmatpush1.msra.mxu0 0.0
  %1613 = vmatprep.subr.mxu0 0.0
  %1614 = vmatpush1.msra.mxu0 0.0
  %1615 = vmatprep.subr.mxu0 0.0
  %1616 = vmatpush1.msra.mxu0 0.0
  %1617 = vmatprep.subr.mxu0 0.0
  %1618 = vmatpush1.msra.mxu0 0.0
  %1619 = vmatprep.subr.mxu0 0.0
  %1620 = vmatpush1.msra.mxu0 0.0
  %1621 = vmatprep.subr.mxu0 0.0
  %1622 = vmatpush1.msra.mxu0 0.0
  %1623 = vmatprep.subr.mxu0 0.0
  %1624 = vmatpush1.msra.mxu0 0.0
  %1625 = vmatprep.subr.mxu0 0.0
  %1626 = vmatpush1.msra.mxu0 0.0
  %1627 = vmatprep.subr.mxu0 0.0
  %1628 = vmatpush1.msra.mxu0 0.0
  %1629 = vmatprep.subr.mxu0 0.0
  %1630 = vmatpush1.msra.mxu0 0.0
  %1631 = vmatprep.subr.mxu0 0.0
  %1632 = vmatpush1.msra.mxu0 0.0
  %1633 = vmatprep.mubr.f32.mxu0 0.0
  %1634 = vmatmul.mubr.f32.gmra.mrb[0].mxu0 %v1522
  %v1635 = vpop.f32.mrb[0].mxu0
  %v1636 = vadd.f32 0.0, %v1635
  %v1637 = vpop.f32.mrb[0].mxu0
  %1638 = vmatprep.mubr.f32.mxu0 0.0
  %1639 = vmatmul.mubr.f32.gmra.mrb[0].mxu0 %v1525
  %v1640 = vpop.f32.mrb[0].mxu0
  %v1641 = vadd.f32 0.0, %v1640
  %v1642 = vpop.f32.mrb[0].mxu0
  %1643 = vmatprep.mubr.f32.mxu0 0.0
  %1644 = vmatmul.mubr.f32.gmra.mrb[0].mxu0 %v1528
  %v1645 = vpop.f32.mrb[0].mxu0
  %v1646 = vadd.f32 0.0, %v1645
  %v1647 = vpop.f32.mrb[0].mxu0
  %1648 = vmatprep.mubr.f32.mxu0 0.0
  %1649 = vmatmul.mubr.f32.gmra.mrb[0].mxu0 %v1531
  %v1650 = vpop.f32.mrb[0].mxu0
  %v1651 = vadd.f32 0.0, %v1650
  %v1652 = vpop.f32.mrb[0].mxu0
  %1653 = vmatprep.mubr.f32.mxu0 0.0
  %1654 = vmatmul.mubr.f32.gmra.mrb[0].mxu0 %v1534
  %v1655 = vpop.f32.mrb[0].mxu0
  %v1656 = vadd.f32 0.0, %v1655
  %v1657 = vpop.f32.mrb[0].mxu0
  %1658 = vmatprep.mubr.f32.mxu0 0.0
  %1659 = vmatmul.mubr.f32.gmra.mrb[0].mxu0 %v1537
  %v1660 = vpop.f32.mrb[0].mxu0
  %v1661 = vadd.f32 0.0, %v1660
  %v1662 = vpop.f32.mrb[0].mxu0
  %1663 = vmatprep.mubr.f32.mxu0 0.0
  %1664 = vmatmul.mubr.f32.gmra.mrb[0].mxu0 %v1540
  %v1665 = vpop.f32.mrb[0].mxu0
  %v1666 = vadd.f32 0.0, %v1665
  %v1667 = vpop.f32.mrb[0].mxu0
  %1668 = vmatprep.mubr.f32.mxu0 0.0
  %1669 = vmatmul.mubr.f32.gmra.mrb[0].mxu0 %v1543
  %v1670 = vpop.f32.mrb[0].mxu0
  %v1671 = vadd.f32 0.0, %v1670
  %v1672 = vpop.f32.mrb[0].mxu0
  %1673 = vmatprep.mubr.f32.mxu0 0.0
  %1674 = vmatmul.mubr.f32.gmra.mrb[0].mxu0 %v1546
  %v1675 = vpop.f32.mrb[0].mxu0
  %v1676 = vadd.f32 0.0, %v1675
  %v1677 = vpop.f32.mrb[0].mxu0
  %1678 = vmatprep.mubr.f32.mxu0 0.0
  %1679 = vmatmul.mubr.f32.gmra.mrb[0].mxu0 %v1549
  %v1680 = vpop.f32.mrb[0].mxu0
  %v1681 = vadd.f32 0.0, %v1680
  %v1682 = vpop.f32.mrb[0].mxu0
  %1683 = vmatprep.mubr.f32.mxu0 0.0
  %1684 = vmatmul.mubr.f32.gmra.mrb[0].mxu0 %v1552
  %v1685 = vpop.f32.mrb[0].mxu0
  %v1686 = vadd.f32 0.0, %v1685
  %v1687 = vpop.f32.mrb[0].mxu0
  %1688 = vmatprep.mubr.f32.mxu0 0.0
  %1689 = vmatmul.mubr.f32.gmra.mrb[0].mxu0 %v1555
  %v1690 = vpop.f32.mrb[0].mxu0
  %v1691 = vadd.f32 0.0, %v1690
  %v1692 = vpop.f32.mrb[0].mxu0
  %1693 = vmatprep.mubr.f32.mxu0 0.0
  %1694 = vmatmul.mubr.f32.gmra.mrb[0].mxu0 %v1558
  %v1695 = vpop.f32.mrb[0].mxu0
  %v1696 = vadd.f32 0.0, %v1695
  %v1697 = vpop.f32.mrb[0].mxu0
  %1698 = vmatprep.mubr.f32.mxu0 0.0
  %1699 = vmatmul.mubr.f32.gmra.mrb[0].mxu0 %v1561
  %v1700 = vpop.f32.mrb[0].mxu0
  %v1701 = vadd.f32 0.0, %v1700
  %v1702 = vpop.f32.mrb[0].mxu0
  %1703 = vmatprep.mubr.f32.mxu0 0.0
  %1704 = vmatmul.mubr.f32.gmra.mrb[0].mxu0 %v1564
  %v1705 = vpop.f32.mrb[0].mxu0
  %v1706 = vadd.f32 0.0, %v1705
  %v1707 = vpop.f32.mrb[0].mxu0
  %1708 = vmatprep.mubr.f32.mxu0 0.0
  %1709 = vmatmul.mubr.f32.gmra.mrb[0].mxu0 %v1567
  %v1710 = vpop.f32.mrb[0].mxu0
  %v1711 = vadd.f32 0.0, %v1710
  %v1712 = vpop.f32.mrb[0].mxu0
  %1713 = vdwg.mxu0
  %1714 = vst.msk [vmem:[%s13] sm:$0xff] %vm49, %v1636
  %1715 = vst.msk [vmem:[%s13 + $0x8] sm:$0xff] %vm49, %v1641
  %1716 = vst.msk [vmem:[%s13 + $0x10] sm:$0xff] %vm49, %v1646
  %1717 = vst.msk [vmem:[%s13 + $0x18] sm:$0xff] %vm49, %v1651
  %1718 = vst.msk [vmem:[%s13 + $0x20] sm:$0xff] %vm49, %v1656
  %1719 = vst.msk [vmem:[%s13 + $0x28] sm:$0xff] %vm49, %v1661
  %1720 = vst.msk [vmem:[%s13 + $0x30] sm:$0xff] %vm49, %v1666
  %1721 = vst.msk [vmem:[%s13 + $0x38] sm:$0xff] %vm49, %v1671
  %1722 = vst.msk [vmem:[%s13 + $0x40] sm:$0xff] %vm49, %v1676
  %1723 = vst.msk [vmem:[%s13 + $0x48] sm:$0xff] %vm49, %v1681
  %1724 = vst.msk [vmem:[%s13 + $0x50] sm:$0xff] %vm49, %v1686
  %1725 = vst.msk [vmem:[%s13 + $0x58] sm:$0xff] %vm49, %v1691
  %1726 = vst.msk [vmem:[%s13 + $0x60] sm:$0xff] %vm49, %v1696
  %1727 = vst.msk [vmem:[%s13 + $0x68] sm:$0xff] %vm49, %v1701
  %1728 = vst.msk [vmem:[%s13 + $0x70] sm:$0xff] %vm49, %v1706
  %1729 = vst.msk [vmem:[%s13 + $0x78] sm:$0xff] %vm49, %v1711
  // Predicated region
  $region42: #{tpu_custom_call.1} parent=0 // pred_check
    _
  $region43: #{tpu_custom_call.1} parent=0 // pred_check_branch
    %1731 = sbr.rel (0) target = $region45
  $region44: #{tpu_custom_call.1} parent=0 // pred_region
    _
  $region45: #{tpu_custom_call.1} parent=0 // pred_fallthru
    _
  // Predicated region
  $region46: #{tpu_custom_call.1} parent=0 // pred_check
    _
  $region47: #{tpu_custom_call.1} parent=0 // pred_check_branch
    %1733 = sbr.rel (0) target = $region49
  $region48: #{tpu_custom_call.1} parent=0 // pred_region
    _
  $region49: #{tpu_custom_call.1} parent=0 // pred_fallthru
    _
  // Predicated region
  $region50: #{tpu_custom_call.1} parent=0 // pred_check
    _
  $region51: #{tpu_custom_call.1} parent=0 // pred_check_branch
    %1735 = sbr.rel (0) target = $region53
  $region52: #{tpu_custom_call.1} parent=0 // pred_region
    _
  $region53: #{tpu_custom_call.1} parent=0 // pred_fallthru
    _
  // Predicated region
  $region54: #{tpu_custom_call.1} parent=0 // pred_check
    _
  $region55: #{tpu_custom_call.1} parent=0 // pred_check_branch
    %1737 = sbr.rel (0) target = $region57
  $region56: #{tpu_custom_call.1} parent=0 // pred_region
    _
  $region57: #{tpu_custom_call.1} parent=0 // pred_fallthru
    _
  // Predicated region
  $region58: #{tpu_custom_call.1} parent=0 // pred_check
    _
  $region59: #{tpu_custom_call.1} parent=0 // pred_check_branch
    %1739 = sbr.rel (0) target = $region61
  $region60: #{tpu_custom_call.1} parent=0 // pred_region
    _
  $region61: #{tpu_custom_call.1} parent=0 // pred_fallthru
    _
  // Predicated region
  $region62: #{tpu_custom_call.1} parent=0 // pred_check
    _
  $region63: #{tpu_custom_call.1} parent=0 // pred_check_branch
    %1741 = sbr.rel (0) target = $region65
  $region64: #{tpu_custom_call.1} parent=0 // pred_region
    _
  $region65: #{tpu_custom_call.1} parent=0 // pred_fallthru
    _
  // Predicated region
  $region66: #{tpu_custom_call.1} parent=0 // pred_check
    _
  $region67: #{tpu_custom_call.1} parent=0 // pred_check_branch
    %1743 = sbr.rel (0) target = $region69
  $region68: #{tpu_custom_call.1} parent=0 // pred_region
    _
  $region69: #{tpu_custom_call.1} parent=0 // pred_fallthru
    _
  // Predicated region
  $region70: #{tpu_custom_call.1} parent=0 // pred_check
    _
  $region71: #{tpu_custom_call.1} parent=0 // pred_check_branch
    %1745 = sbr.rel (0) target = $region73
  $region72: #{tpu_custom_call.1} parent=0 // pred_region
    _
  $region73: #{tpu_custom_call.1} parent=0 // pred_fallthru
    _

</llo_original>
